<compile_context>
chip_gen: v5e
topology: v5e:2x2
jax: 0.10.0
libtpu: 0.0.40
codegen_flags: <defaults>
</compile_context>

<pallas_src>
import functools

import jax
import jax.numpy as jnp
from jax.experimental import pallas as pl
from jax.experimental.pallas import tpu as pltpu


def _patchify_kernel_wide(x_ref, o_ref, *, C, p):
    # x_ref: (C, R, p, n_pw, p)   == x[b, c, i0*R + r, kh, j, kw] for this row block
    # o_ref: (R, n_pw, C*p*p)
    # Assemble the whole row block with one lane-axis concatenate (pieces ordered
    # (c, kh), each contributing p lanes of kw) and one full-width store.
    pieces = [x_ref[c, :, kh, :, :] for c in range(C) for kh in range(p)]
    o_ref[...] = jnp.concatenate(pieces, axis=-1)


def _patchify_kernel_sliced(x_ref, o_ref, *, C, p):
    # Fallback assembly using only plain slice loads/stores (no concatenate):
    # same semantics, C*p lane-sliced stores into the lane-dense output tile.
    for c in range(C):
        for kh in range(p):
            off = (c * p + kh) * p
            o_ref[:, :, off:off + p] = x_ref[c, :, kh, :, :]


def _round_up(v, m):
    return (v + m - 1) // m * m


def _pick_rows_per_block(n_ph, n_pw, C, p, itemsize, budget_bytes):
    """Largest divisor of n_ph whose padded (input + output) block fits the budget.

    Pallas double-buffers each operand, so resident VMEM is ~2x this estimate;
    the default budget keeps that well under the default scoped-VMEM limits and
    v7x's smaller physical VMEM.
    """
    sub = max(8, 8 * (4 // max(1, itemsize)))  # second-minor tile: 8 f32, 16 bf16, 32 i8

    def block_bytes(d):
        in_bytes = C * d * p * _round_up(n_pw, sub) * _round_up(p, 128) * itemsize
        out_bytes = d * _round_up(n_pw, sub) * _round_up(C * p * p, 128) * itemsize
        return in_bytes + out_bytes

    best = 1
    for d in range(1, n_ph + 1):
        if n_ph % d == 0 and block_bytes(d) <= budget_bytes:
            best = d
    return best


def patchify(x, patch_size, *, vmem_block_budget_bytes=4 << 20):
    """Equivalent of Patchify(patch_size)(x) for NCHW input x."""
    B, C, H, W = x.shape
    p = patch_size
    assert H % p == 0 and W % p == 0, "spatial dims must be divisible by patch_size"
    n_ph, n_pw = H // p, W // p
    L, cpp = n_ph * n_pw, C * p * p

    itemsize = jnp.dtype(x.dtype).itemsize
    R = _pick_rows_per_block(n_ph, n_pw, C, p, itemsize, vmem_block_budget_bytes)

    # Free (metadata-only) reshape: split H -> (n_ph, p) and W -> (n_pw, p).
    # All actual data movement / relayout happens inside the Pallas kernel.
    x6 = x.reshape(B, C, n_ph, p, n_pw, p)

    def run(kernel_body):
        kernel = functools.partial(kernel_body, C=C, p=p)
        return pl.pallas_call(
            kernel,
            out_shape=jax.ShapeDtypeStruct((B, n_ph, n_pw, cpp), x.dtype),
            grid_spec=pltpu.PrefetchScalarGridSpec(
                num_scalar_prefetch=0,
                grid=(B, n_ph // R),
                in_specs=[
                    pl.BlockSpec(
                        (None, C, R, p, n_pw, p),
                        lambda b, i: (b, 0, i, 0, 0, 0),
                    ),
                ],
                out_specs=pl.BlockSpec(
                    (None, R, n_pw, cpp),
                    lambda b, i: (b, i, 0, 0),
                ),
            ),
            compiler_params=pltpu.CompilerParams(
                dimension_semantics=("parallel", "parallel"),
            ),
        )(x6)

    try:
        out = run(_patchify_kernel_wide)
    except Exception:
        # Older Mosaic versions may not support unaligned lane-axis concatenation;
        # fall back to the slice-store assembly (still the same lane-dense,
        # row-block-tiled Pallas kernel).
        out = run(_patchify_kernel_sliced)

    # Contiguous (free) reshape: (B, n_ph, n_pw, C*p*p) -> (B, L, C*p*p).
    return out.reshape(B, L, cpp)


def _reference_patchify(x, p):
    """Pure-JAX reference mirroring nn.Unfold(p, stride=p) + permute(0, 2, 1)."""
    B, C, H, W = x.shape
    n_ph, n_pw = H // p, W // p
    y = x.reshape(B, C, n_ph, p, n_pw, p)
    y = jnp.transpose(y, (0, 2, 4, 1, 3, 5))  # (B, n_ph, n_pw, C, p, p)
    return y.reshape(B, n_ph * n_pw, C * p * p)


if __name__ == "__main__":
    key = jax.random.PRNGKey(0)

    # Small deterministic example consistent with the module: B=2, C=4,
    # H=W=16, patch_size=4 -> output (2, 16, 64).
    B, C, H, W = 2, 4, 16, 16
    patch_size = 4
    x = jax.random.normal(key, (B, C, H, W), dtype=jnp.float32)

    out = jax.block_until_ready(patchify(x, patch_size))
    ref = _reference_patchify(x, patch_size)
    assert out.shape == (
        B,
        (H // patch_size) * (W // patch_size),
        C * patch_size * patch_size,
    ), out.shape
    assert jnp.allclose(out, ref), "Pallas patchify mismatch vs reference"

    # Second config (different C / p / spatial size) exercising the same specs.
    key2 = jax.random.PRNGKey(1)
    x2 = jax.random.normal(key2, (2, 3, 32, 32), dtype=jnp.float32)
    out2 = jax.block_until_ready(patchify(x2, 8))
    ref2 = _reference_patchify(x2, 8)
    assert out2.shape == (2, 16, 192), out2.shape
    assert jnp.allclose(out2, ref2), "Pallas patchify mismatch vs reference (cfg 2)"

    print("KERNEL_OK")
</pallas_src>

<mosaic_0001>
module attributes {stable_mosaic.version = 11 : i64} {
  func.func @_patchify_kernel_wide(%arg0: i32, %arg1: i32, %arg2: memref<1x4x4x4x4x4xf32, #tpu.memory_space<vmem>>, %arg3: memref<1x4x4x64xf32, #tpu.memory_space<vmem>>) attributes {dimension_semantics = [#tpu.dimension_semantics<parallel>, #tpu.dimension_semantics<parallel>], iteration_bounds = array<i64: 2, 1>, scalar_prefetch = 0 : i64, scratch_operands = 0 : i64, tpu.core_type = #tpu.core_type<tc>, window_params = [{transform_indices = @transform_0, window_bounds = array<i64: 1, 4, 4, 4, 4, 4>}, {transform_indices = @transform_1, window_bounds = array<i64: 1, 4, 4, 64>}]} {
    %c0 = arith.constant 0 : index
    %c0_0 = arith.constant 0 : index
    %c0_1 = arith.constant 0 : index
    %c0_2 = arith.constant 0 : index
    %c0_3 = arith.constant 0 : index
    %c0_4 = arith.constant 0 : index
    %0 = vector.load %arg2[%c0, %c0_0, %c0_1, %c0_2, %c0_3, %c0_4] : memref<1x4x4x4x4x4xf32, #tpu.memory_space<vmem>>, vector<1x1x4x1x4x4xf32>
    %1 = vector.shape_cast %0 : vector<1x1x4x1x4x4xf32> to vector<4x4x4xf32>
    %c0_5 = arith.constant 0 : index
    %c0_6 = arith.constant 0 : index
    %c0_7 = arith.constant 0 : index
    %c1 = arith.constant 1 : index
    %c0_8 = arith.constant 0 : index
    %c0_9 = arith.constant 0 : index
    %2 = vector.load %arg2[%c0_5, %c0_6, %c0_7, %c1, %c0_8, %c0_9] : memref<1x4x4x4x4x4xf32, #tpu.memory_space<vmem>>, vector<1x1x4x1x4x4xf32>
    %3 = vector.shape_cast %2 : vector<1x1x4x1x4x4xf32> to vector<4x4x4xf32>
    %c0_10 = arith.constant 0 : index
    %c0_11 = arith.constant 0 : index
    %c0_12 = arith.constant 0 : index
    %c2 = arith.constant 2 : index
    %c0_13 = arith.constant 0 : index
    %c0_14 = arith.constant 0 : index
    %4 = vector.load %arg2[%c0_10, %c0_11, %c0_12, %c2, %c0_13, %c0_14] : memref<1x4x4x4x4x4xf32, #tpu.memory_space<vmem>>, vector<1x1x4x1x4x4xf32>
    %5 = vector.shape_cast %4 : vector<1x1x4x1x4x4xf32> to vector<4x4x4xf32>
    %c0_15 = arith.constant 0 : index
    %c0_16 = arith.constant 0 : index
    %c0_17 = arith.constant 0 : index
    %c3 = arith.constant 3 : index
    %c0_18 = arith.constant 0 : index
    %c0_19 = arith.constant 0 : index
    %6 = vector.load %arg2[%c0_15, %c0_16, %c0_17, %c3, %c0_18, %c0_19] : memref<1x4x4x4x4x4xf32, #tpu.memory_space<vmem>>, vector<1x1x4x1x4x4xf32>
    %7 = vector.shape_cast %6 : vector<1x1x4x1x4x4xf32> to vector<4x4x4xf32>
    %c0_20 = arith.constant 0 : index
    %c1_21 = arith.constant 1 : index
    %c0_22 = arith.constant 0 : index
    %c0_23 = arith.constant 0 : index
    %c0_24 = arith.constant 0 : index
    %c0_25 = arith.constant 0 : index
    %8 = vector.load %arg2[%c0_20, %c1_21, %c0_22, %c0_23, %c0_24, %c0_25] : memref<1x4x4x4x4x4xf32, #tpu.memory_space<vmem>>, vector<1x1x4x1x4x4xf32>
    %9 = vector.shape_cast %8 : vector<1x1x4x1x4x4xf32> to vector<4x4x4xf32>
    %c0_26 = arith.constant 0 : index
    %c1_27 = arith.constant 1 : index
    %c0_28 = arith.constant 0 : index
    %c1_29 = arith.constant 1 : index
    %c0_30 = arith.constant 0 : index
    %c0_31 = arith.constant 0 : index
    %10 = vector.load %arg2[%c0_26, %c1_27, %c0_28, %c1_29, %c0_30, %c0_31] : memref<1x4x4x4x4x4xf32, #tpu.memory_space<vmem>>, vector<1x1x4x1x4x4xf32>
    %11 = vector.shape_cast %10 : vector<1x1x4x1x4x4xf32> to vector<4x4x4xf32>
    %c0_32 = arith.constant 0 : index
    %c1_33 = arith.constant 1 : index
    %c0_34 = arith.constant 0 : index
    %c2_35 = arith.constant 2 : index
    %c0_36 = arith.constant 0 : index
    %c0_37 = arith.constant 0 : index
    %12 = vector.load %arg2[%c0_32, %c1_33, %c0_34, %c2_35, %c0_36, %c0_37] : memref<1x4x4x4x4x4xf32, #tpu.memory_space<vmem>>, vector<1x1x4x1x4x4xf32>
    %13 = vector.shape_cast %12 : vector<1x1x4x1x4x4xf32> to vector<4x4x4xf32>
    %c0_38 = arith.constant 0 : index
    %c1_39 = arith.constant 1 : index
    %c0_40 = arith.constant 0 : index
    %c3_41 = arith.constant 3 : index
    %c0_42 = arith.constant 0 : index
    %c0_43 = arith.constant 0 : index
    %14 = vector.load %arg2[%c0_38, %c1_39, %c0_40, %c3_41, %c0_42, %c0_43] : memref<1x4x4x4x4x4xf32, #tpu.memory_space<vmem>>, vector<1x1x4x1x4x4xf32>
    %15 = vector.shape_cast %14 : vector<1x1x4x1x4x4xf32> to vector<4x4x4xf32>
    %c0_44 = arith.constant 0 : index
    %c2_45 = arith.constant 2 : index
    %c0_46 = arith.constant 0 : index
    %c0_47 = arith.constant 0 : index
    %c0_48 = arith.constant 0 : index
    %c0_49 = arith.constant 0 : index
    %16 = vector.load %arg2[%c0_44, %c2_45, %c0_46, %c0_47, %c0_48, %c0_49] : memref<1x4x4x4x4x4xf32, #tpu.memory_space<vmem>>, vector<1x1x4x1x4x4xf32>
    %17 = vector.shape_cast %16 : vector<1x1x4x1x4x4xf32> to vector<4x4x4xf32>
    %c0_50 = arith.constant 0 : index
    %c2_51 = arith.constant 2 : index
    %c0_52 = arith.constant 0 : index
    %c1_53 = arith.constant 1 : index
    %c0_54 = arith.constant 0 : index
    %c0_55 = arith.constant 0 : index
    %18 = vector.load %arg2[%c0_50, %c2_51, %c0_52, %c1_53, %c0_54, %c0_55] : memref<1x4x4x4x4x4xf32, #tpu.memory_space<vmem>>, vector<1x1x4x1x4x4xf32>
    %19 = vector.shape_cast %18 : vector<1x1x4x1x4x4xf32> to vector<4x4x4xf32>
    %c0_56 = arith.constant 0 : index
    %c2_57 = arith.constant 2 : index
    %c0_58 = arith.constant 0 : index
    %c2_59 = arith.constant 2 : index
    %c0_60 = arith.constant 0 : index
    %c0_61 = arith.constant 0 : index
    %20 = vector.load %arg2[%c0_56, %c2_57, %c0_58, %c2_59, %c0_60, %c0_61] : memref<1x4x4x4x4x4xf32, #tpu.memory_space<vmem>>, vector<1x1x4x1x4x4xf32>
    %21 = vector.shape_cast %20 : vector<1x1x4x1x4x4xf32> to vector<4x4x4xf32>
    %c0_62 = arith.constant 0 : index
    %c2_63 = arith.constant 2 : index
    %c0_64 = arith.constant 0 : index
    %c3_65 = arith.constant 3 : index
    %c0_66 = arith.constant 0 : index
    %c0_67 = arith.constant 0 : index
    %22 = vector.load %arg2[%c0_62, %c2_63, %c0_64, %c3_65, %c0_66, %c0_67] : memref<1x4x4x4x4x4xf32, #tpu.memory_space<vmem>>, vector<1x1x4x1x4x4xf32>
    %23 = vector.shape_cast %22 : vector<1x1x4x1x4x4xf32> to vector<4x4x4xf32>
    %c0_68 = arith.constant 0 : index
    %c3_69 = arith.constant 3 : index
    %c0_70 = arith.constant 0 : index
    %c0_71 = arith.constant 0 : index
    %c0_72 = arith.constant 0 : index
    %c0_73 = arith.constant 0 : index
    %24 = vector.load %arg2[%c0_68, %c3_69, %c0_70, %c0_71, %c0_72, %c0_73] : memref<1x4x4x4x4x4xf32, #tpu.memory_space<vmem>>, vector<1x1x4x1x4x4xf32>
    %25 = vector.shape_cast %24 : vector<1x1x4x1x4x4xf32> to vector<4x4x4xf32>
    %c0_74 = arith.constant 0 : index
    %c3_75 = arith.constant 3 : index
    %c0_76 = arith.constant 0 : index
    %c1_77 = arith.constant 1 : index
    %c0_78 = arith.constant 0 : index
    %c0_79 = arith.constant 0 : index
    %26 = vector.load %arg2[%c0_74, %c3_75, %c0_76, %c1_77, %c0_78, %c0_79] : memref<1x4x4x4x4x4xf32, #tpu.memory_space<vmem>>, vector<1x1x4x1x4x4xf32>
    %27 = vector.shape_cast %26 : vector<1x1x4x1x4x4xf32> to vector<4x4x4xf32>
    %c0_80 = arith.constant 0 : index
    %c3_81 = arith.constant 3 : index
    %c0_82 = arith.constant 0 : index
    %c2_83 = arith.constant 2 : index
    %c0_84 = arith.constant 0 : index
    %c0_85 = arith.constant 0 : index
    %28 = vector.load %arg2[%c0_80, %c3_81, %c0_82, %c2_83, %c0_84, %c0_85] : memref<1x4x4x4x4x4xf32, #tpu.memory_space<vmem>>, vector<1x1x4x1x4x4xf32>
    %29 = vector.shape_cast %28 : vector<1x1x4x1x4x4xf32> to vector<4x4x4xf32>
    %c0_86 = arith.constant 0 : index
    %c3_87 = arith.constant 3 : index
    %c0_88 = arith.constant 0 : index
    %c3_89 = arith.constant 3 : index
    %c0_90 = arith.constant 0 : index
    %c0_91 = arith.constant 0 : index
    %30 = vector.load %arg2[%c0_86, %c3_87, %c0_88, %c3_89, %c0_90, %c0_91] : memref<1x4x4x4x4x4xf32, #tpu.memory_space<vmem>>, vector<1x1x4x1x4x4xf32>
    %31 = vector.shape_cast %30 : vector<1x1x4x1x4x4xf32> to vector<4x4x4xf32>
    %32 = tpu.concatenate %1, %3, %5, %7, %9, %11, %13, %15, %17, %19, %21, %23, %25, %27, %29, %31 in 2 : vector<4x4x4xf32>, vector<4x4x4xf32>, vector<4x4x4xf32>, vector<4x4x4xf32>, vector<4x4x4xf32>, vector<4x4x4xf32>, vector<4x4x4xf32>, vector<4x4x4xf32>, vector<4x4x4xf32>, vector<4x4x4xf32>, vector<4x4x4xf32>, vector<4x4x4xf32>, vector<4x4x4xf32>, vector<4x4x4xf32>, vector<4x4x4xf32>, vector<4x4x4xf32> -> vector<4x4x64xf32>
    %c0_92 = arith.constant 0 : index
    %c0_93 = arith.constant 0 : index
    %c0_94 = arith.constant 0 : index
    %c0_95 = arith.constant 0 : index
    %33 = vector.load %arg3[%c0_92, %c0_93, %c0_94, %c0_95] : memref<1x4x4x64xf32, #tpu.memory_space<vmem>>, vector<1x4x4x64xf32>
    %34 = vector.shape_cast %33 : vector<1x4x4x64xf32> to vector<4x4x64xf32>
    %35 = vector.shape_cast %32 : vector<4x4x64xf32> to vector<1x4x4x64xf32>
    tpu.vector_store %arg3[%c0_92, %c0_93, %c0_94, %c0_95], %35 {strides = array<i32>} : memref<1x4x4x64xf32, #tpu.memory_space<vmem>>, vector<1x4x4x64xf32>,
    return
  }
  func.func @transform_0(%arg0: i32, %arg1: i32) -> (i32, i32, i32, i32, i32, i32) {
    %c0_i32 = arith.constant 0 : i32
    %c0_i32_0 = arith.constant 0 : i32
    %c0_i32_1 = arith.constant 0 : i32
    %c0_i32_2 = arith.constant 0 : i32
    %c0_i32_3 = arith.constant 0 : i32
    return %arg0, %c0_i32, %arg1, %c0_i32_0, %c0_i32_1, %c0_i32_2 : i32, i32, i32, i32, i32, i32
  }
  func.func @transform_1(%arg0: i32, %arg1: i32) -> (i32, i32, i32, i32) {
    %c0_i32 = arith.constant 0 : i32
    %c0_i32_0 = arith.constant 0 : i32
    %c0_i32_1 = arith.constant 0 : i32
    return %arg0, %arg1, %c0_i32, %c0_i32_0 : i32, i32, i32, i32
  }
}

module attributes {stable_mosaic.version = 11 : i64} {
  func.func @_patchify_kernel_sliced(%arg0: i32, %arg1: i32, %arg2: memref<1x4x4x4x4x4xf32, #tpu.memory_space<vmem>>, %arg3: memref<1x4x4x64xf32, #tpu.memory_space<vmem>>) attributes {dimension_semantics = [#tpu.dimension_semantics<parallel>, #tpu.dimension_semantics<parallel>], iteration_bounds = array<i64: 2, 1>, scalar_prefetch = 0 : i64, scratch_operands = 0 : i64, tpu.core_type = #tpu.core_type<tc>, window_params = [{transform_indices = @transform_0, window_bounds = array<i64: 1, 4, 4, 4, 4, 4>}, {transform_indices = @transform_1, window_bounds = array<i64: 1, 4, 4, 64>}]} {
    %c0 = arith.constant 0 : index
    %c0_0 = arith.constant 0 : index
    %c0_1 = arith.constant 0 : index
    %c0_2 = arith.constant 0 : index
    %c0_3 = arith.constant 0 : index
    %c0_4 = arith.constant 0 : index
    %0 = vector.load %arg2[%c0, %c0_0, %c0_1, %c0_2, %c0_3, %c0_4] : memref<1x4x4x4x4x4xf32, #tpu.memory_space<vmem>>, vector<1x1x4x1x4x4xf32>
    %1 = vector.shape_cast %0 : vector<1x1x4x1x4x4xf32> to vector<4x4x4xf32>
    %c0_5 = arith.constant 0 : index
    %c0_6 = arith.constant 0 : index
    %c0_7 = arith.constant 0 : index
    %c0_8 = arith.constant 0 : index
    %2 = vector.load %arg3[%c0_5, %c0_6, %c0_7, %c0_8] : memref<1x4x4x64xf32, #tpu.memory_space<vmem>>, vector<1x4x4x4xf32>
    %3 = vector.shape_cast %2 : vector<1x4x4x4xf32> to vector<4x4x4xf32>
    %4 = vector.shape_cast %1 : vector<4x4x4xf32> to vector<1x4x4x4xf32>
    tpu.vector_store %arg3[%c0_5, %c0_6, %c0_7, %c0_8], %4 {strides = array<i32>} : memref<1x4x4x64xf32, #tpu.memory_space<vmem>>, vector<1x4x4x4xf32>,
    %c0_9 = arith.constant 0 : index
    %c0_10 = arith.constant 0 : index
    %c0_11 = arith.constant 0 : index
    %c1 = arith.constant 1 : index
    %c0_12 = arith.constant 0 : index
    %c0_13 = arith.constant 0 : index
    %5 = vector.load %arg2[%c0_9, %c0_10, %c0_11, %c1, %c0_12, %c0_13] : memref<1x4x4x4x4x4xf32, #tpu.memory_space<vmem>>, vector<1x1x4x1x4x4xf32>
    %6 = vector.shape_cast %5 : vector<1x1x4x1x4x4xf32> to vector<4x4x4xf32>
    %c0_14 = arith.constant 0 : index
    %c0_15 = arith.constant 0 : index
    %c0_16 = arith.constant 0 : index
    %c4 = arith.constant 4 : index
    %7 = vector.load %arg3[%c0_14, %c0_15, %c0_16, %c4] : memref<1x4x4x64xf32, #tpu.memory_space<vmem>>, vector<1x4x4x4xf32>
    %8 = vector.shape_cast %7 : vector<1x4x4x4xf32> to vector<4x4x4xf32>
    %9 = vector.shape_cast %6 : vector<4x4x4xf32> to vector<1x4x4x4xf32>
    tpu.vector_store %arg3[%c0_14, %c0_15, %c0_16, %c4], %9 {strides = array<i32>} : memref<1x4x4x64xf32, #tpu.memory_space<vmem>>, vector<1x4x4x4xf32>,
    %c0_17 = arith.constant 0 : index
    %c0_18 = arith.constant 0 : index
    %c0_19 = arith.constant 0 : index
    %c2 = arith.constant 2 : index
    %c0_20 = arith.constant 0 : index
    %c0_21 = arith.constant 0 : index
    %10 = vector.load %arg2[%c0_17, %c0_18, %c0_19, %c2, %c0_20, %c0_21] : memref<1x4x4x4x4x4xf32, #tpu.memory_space<vmem>>, vector<1x1x4x1x4x4xf32>
    %11 = vector.shape_cast %10 : vector<1x1x4x1x4x4xf32> to vector<4x4x4xf32>
    %c0_22 = arith.constant 0 : index
    %c0_23 = arith.constant 0 : index
    %c0_24 = arith.constant 0 : index
    %c8 = arith.constant 8 : index
    %12 = vector.load %arg3[%c0_22, %c0_23, %c0_24, %c8] : memref<1x4x4x64xf32, #tpu.memory_space<vmem>>, vector<1x4x4x4xf32>
    %13 = vector.shape_cast %12 : vector<1x4x4x4xf32> to vector<4x4x4xf32>
    %14 = vector.shape_cast %11 : vector<4x4x4xf32> to vector<1x4x4x4xf32>
    tpu.vector_store %arg3[%c0_22, %c0_23, %c0_24, %c8], %14 {strides = array<i32>} : memref<1x4x4x64xf32, #tpu.memory_space<vmem>>, vector<1x4x4x4xf32>,
    %c0_25 = arith.constant 0 : index
    %c0_26 = arith.constant 0 : index
    %c0_27 = arith.constant 0 : index
    %c3 = arith.constant 3 : index
    %c0_28 = arith.constant 0 : index
    %c0_29 = arith.constant 0 : index
    %15 = vector.load %arg2[%c0_25, %c0_26, %c0_27, %c3, %c0_28, %c0_29] : memref<1x4x4x4x4x4xf32, #tpu.memory_space<vmem>>, vector<1x1x4x1x4x4xf32>
    %16 = vector.shape_cast %15 : vector<1x1x4x1x4x4xf32> to vector<4x4x4xf32>
    %c0_30 = arith.constant 0 : index
    %c0_31 = arith.constant 0 : index
    %c0_32 = arith.constant 0 : index
    %c12 = arith.constant 12 : index
    %17 = vector.load %arg3[%c0_30, %c0_31, %c0_32, %c12] : memref<1x4x4x64xf32, #tpu.memory_space<vmem>>, vector<1x4x4x4xf32>
    %18 = vector.shape_cast %17 : vector<1x4x4x4xf32> to vector<4x4x4xf32>
    %19 = vector.shape_cast %16 : vector<4x4x4xf32> to vector<1x4x4x4xf32>
    tpu.vector_store %arg3[%c0_30, %c0_31, %c0_32, %c12], %19 {strides = array<i32>} : memref<1x4x4x64xf32, #tpu.memory_space<vmem>>, vector<1x4x4x4xf32>,
    %c0_33 = arith.constant 0 : index
    %c1_34 = arith.constant 1 : index
    %c0_35 = arith.constant 0 : index
    %c0_36 = arith.constant 0 : index
    %c0_37 = arith.constant 0 : index
    %c0_38 = arith.constant 0 : index
    %20 = vector.load %arg2[%c0_33, %c1_34, %c0_35, %c0_36, %c0_37, %c0_38] : memref<1x4x4x4x4x4xf32, #tpu.memory_space<vmem>>, vector<1x1x4x1x4x4xf32>
    %21 = vector.shape_cast %20 : vector<1x1x4x1x4x4xf32> to vector<4x4x4xf32>
    %c0_39 = arith.constant 0 : index
    %c0_40 = arith.constant 0 : index
    %c0_41 = arith.constant 0 : index
    %c16 = arith.constant 16 : index
    %22 = vector.load %arg3[%c0_39, %c0_40, %c0_41, %c16] : memref<1x4x4x64xf32, #tpu.memory_space<vmem>>, vector<1x4x4x4xf32>
    %23 = vector.shape_cast %22 : vector<1x4x4x4xf32> to vector<4x4x4xf32>
    %24 = vector.shape_cast %21 : vector<4x4x4xf32> to vector<1x4x4x4xf32>
    tpu.vector_store %arg3[%c0_39, %c0_40, %c0_41, %c16], %24 {strides = array<i32>} : memref<1x4x4x64xf32, #tpu.memory_space<vmem>>, vector<1x4x4x4xf32>,
    %c0_42 = arith.constant 0 : index
    %c1_43 = arith.constant 1 : index
    %c0_44 = arith.constant 0 : index
    %c1_45 = arith.constant 1 : index
    %c0_46 = arith.constant 0 : index
    %c0_47 = arith.constant 0 : index
    %25 = vector.load %arg2[%c0_42, %c1_43, %c0_44, %c1_45, %c0_46, %c0_47] : memref<1x4x4x4x4x4xf32, #tpu.memory_space<vmem>>, vector<1x1x4x1x4x4xf32>
    %26 = vector.shape_cast %25 : vector<1x1x4x1x4x4xf32> to vector<4x4x4xf32>
    %c0_48 = arith.constant 0 : index
    %c0_49 = arith.constant 0 : index
    %c0_50 = arith.constant 0 : index
    %c20 = arith.constant 20 : index
    %27 = vector.load %arg3[%c0_48, %c0_49, %c0_50, %c20] : memref<1x4x4x64xf32, #tpu.memory_space<vmem>>, vector<1x4x4x4xf32>
    %28 = vector.shape_cast %27 : vector<1x4x4x4xf32> to vector<4x4x4xf32>
    %29 = vector.shape_cast %26 : vector<4x4x4xf32> to vector<1x4x4x4xf32>
    tpu.vector_store %arg3[%c0_48, %c0_49, %c0_50, %c20], %29 {strides = array<i32>} : memref<1x4x4x64xf32, #tpu.memory_space<vmem>>, vector<1x4x4x4xf32>,
    %c0_51 = arith.constant 0 : index
    %c1_52 = arith.constant 1 : index
    %c0_53 = arith.constant 0 : index
    %c2_54 = arith.constant 2 : index
    %c0_55 = arith.constant 0 : index
    %c0_56 = arith.constant 0 : index
    %30 = vector.load %arg2[%c0_51, %c1_52, %c0_53, %c2_54, %c0_55, %c0_56] : memref<1x4x4x4x4x4xf32, #tpu.memory_space<vmem>>, vector<1x1x4x1x4x4xf32>
    %31 = vector.shape_cast %30 : vector<1x1x4x1x4x4xf32> to vector<4x4x4xf32>
    %c0_57 = arith.constant 0 : index
    %c0_58 = arith.constant 0 : index
    %c0_59 = arith.constant 0 : index
    %c24 = arith.constant 24 : index
    %32 = vector.load %arg3[%c0_57, %c0_58, %c0_59, %c24] : memref<1x4x4x64xf32, #tpu.memory_space<vmem>>, vector<1x4x4x4xf32>
    %33 = vector.shape_cast %32 : vector<1x4x4x4xf32> to vector<4x4x4xf32>
    %34 = vector.shape_cast %31 : vector<4x4x4xf32> to vector<1x4x4x4xf32>
    tpu.vector_store %arg3[%c0_57, %c0_58, %c0_59, %c24], %34 {strides = array<i32>} : memref<1x4x4x64xf32, #tpu.memory_space<vmem>>, vector<1x4x4x4xf32>,
    %c0_60 = arith.constant 0 : index
    %c1_61 = arith.constant 1 : index
    %c0_62 = arith.constant 0 : index
    %c3_63 = arith.constant 3 : index
    %c0_64 = arith.constant 0 : index
    %c0_65 = arith.constant 0 : index
    %35 = vector.load %arg2[%c0_60, %c1_61, %c0_62, %c3_63, %c0_64, %c0_65] : memref<1x4x4x4x4x4xf32, #tpu.memory_space<vmem>>, vector<1x1x4x1x4x4xf32>
    %36 = vector.shape_cast %35 : vector<1x1x4x1x4x4xf32> to vector<4x4x4xf32>
    %c0_66 = arith.constant 0 : index
    %c0_67 = arith.constant 0 : index
    %c0_68 = arith.constant 0 : index
    %c28 = arith.constant 28 : index
    %37 = vector.load %arg3[%c0_66, %c0_67, %c0_68, %c28] : memref<1x4x4x64xf32, #tpu.memory_space<vmem>>, vector<1x4x4x4xf32>
    %38 = vector.shape_cast %37 : vector<1x4x4x4xf32> to vector<4x4x4xf32>
    %39 = vector.shape_cast %36 : vector<4x4x4xf32> to vector<1x4x4x4xf32>
    tpu.vector_store %arg3[%c0_66, %c0_67, %c0_68, %c28], %39 {strides = array<i32>} : memref<1x4x4x64xf32, #tpu.memory_space<vmem>>, vector<1x4x4x4xf32>,
    %c0_69 = arith.constant 0 : index
    %c2_70 = arith.constant 2 : index
    %c0_71 = arith.constant 0 : index
    %c0_72 = arith.constant 0 : index
    %c0_73 = arith.constant 0 : index
    %c0_74 = arith.constant 0 : index
    %40 = vector.load %arg2[%c0_69, %c2_70, %c0_71, %c0_72, %c0_73, %c0_74] : memref<1x4x4x4x4x4xf32, #tpu.memory_space<vmem>>, vector<1x1x4x1x4x4xf32>
    %41 = vector.shape_cast %40 : vector<1x1x4x1x4x4xf32> to vector<4x4x4xf32>
    %c0_75 = arith.constant 0 : index
    %c0_76 = arith.constant 0 : index
    %c0_77 = arith.constant 0 : index
    %c32 = arith.constant 32 : index
    %42 = vector.load %arg3[%c0_75, %c0_76, %c0_77, %c32] : memref<1x4x4x64xf32, #tpu.memory_space<vmem>>, vector<1x4x4x4xf32>
    %43 = vector.shape_cast %42 : vector<1x4x4x4xf32> to vector<4x4x4xf32>
    %44 = vector.shape_cast %41 : vector<4x4x4xf32> to vector<1x4x4x4xf32>
    tpu.vector_store %arg3[%c0_75, %c0_76, %c0_77, %c32], %44 {strides = array<i32>} : memref<1x4x4x64xf32, #tpu.memory_space<vmem>>, vector<1x4x4x4xf32>,
    %c0_78 = arith.constant 0 : index
    %c2_79 = arith.constant 2 : index
    %c0_80 = arith.constant 0 : index
    %c1_81 = arith.constant 1 : index
    %c0_82 = arith.constant 0 : index
    %c0_83 = arith.constant 0 : index
    %45 = vector.load %arg2[%c0_78, %c2_79, %c0_80, %c1_81, %c0_82, %c0_83] : memref<1x4x4x4x4x4xf32, #tpu.memory_space<vmem>>, vector<1x1x4x1x4x4xf32>
    %46 = vector.shape_cast %45 : vector<1x1x4x1x4x4xf32> to vector<4x4x4xf32>
    %c0_84 = arith.constant 0 : index
    %c0_85 = arith.constant 0 : index
    %c0_86 = arith.constant 0 : index
    %c36 = arith.constant 36 : index
    %47 = vector.load %arg3[%c0_84, %c0_85, %c0_86, %c36] : memref<1x4x4x64xf32, #tpu.memory_space<vmem>>, vector<1x4x4x4xf32>
    %48 = vector.shape_cast %47 : vector<1x4x4x4xf32> to vector<4x4x4xf32>
    %49 = vector.shape_cast %46 : vector<4x4x4xf32> to vector<1x4x4x4xf32>
    tpu.vector_store %arg3[%c0_84, %c0_85, %c0_86, %c36], %49 {strides = array<i32>} : memref<1x4x4x64xf32, #tpu.memory_space<vmem>>, vector<1x4x4x4xf32>,
    %c0_87 = arith.constant 0 : index
    %c2_88 = arith.constant 2 : index
    %c0_89 = arith.constant 0 : index
    %c2_90 = arith.constant 2 : index
    %c0_91 = arith.constant 0 : index
    %c0_92 = arith.constant 0 : index
    %50 = vector.load %arg2[%c0_87, %c2_88, %c0_89, %c2_90, %c0_91, %c0_92] : memref<1x4x4x4x4x4xf32, #tpu.memory_space<vmem>>, vector<1x1x4x1x4x4xf32>
    %51 = vector.shape_cast %50 : vector<1x1x4x1x4x4xf32> to vector<4x4x4xf32>
    %c0_93 = arith.constant 0 : index
    %c0_94 = arith.constant 0 : index
    %c0_95 = arith.constant 0 : index
    %c40 = arith.constant 40 : index
    %52 = vector.load %arg3[%c0_93, %c0_94, %c0_95, %c40] : memref<1x4x4x64xf32, #tpu.memory_space<vmem>>, vector<1x4x4x4xf32>
    %53 = vector.shape_cast %52 : vector<1x4x4x4xf32> to vector<4x4x4xf32>
    %54 = vector.shape_cast %51 : vector<4x4x4xf32> to vector<1x4x4x4xf32>
    tpu.vector_store %arg3[%c0_93, %c0_94, %c0_95, %c40], %54 {strides = array<i32>} : memref<1x4x4x64xf32, #tpu.memory_space<vmem>>, vector<1x4x4x4xf32>,
    %c0_96 = arith.constant 0 : index
    %c2_97 = arith.constant 2 : index
    %c0_98 = arith.constant 0 : index
    %c3_99 = arith.constant 3 : index
    %c0_100 = arith.constant 0 : index
    %c0_101 = arith.constant 0 : index
    %55 = vector.load %arg2[%c0_96, %c2_97, %c0_98, %c3_99, %c0_100, %c0_101] : memref<1x4x4x4x4x4xf32, #tpu.memory_space<vmem>>, vector<1x1x4x1x4x4xf32>
    %56 = vector.shape_cast %55 : vector<1x1x4x1x4x4xf32> to vector<4x4x4xf32>
    %c0_102 = arith.constant 0 : index
    %c0_103 = arith.constant 0 : index
    %c0_104 = arith.constant 0 : index
    %c44 = arith.constant 44 : index
    %57 = vector.load %arg3[%c0_102, %c0_103, %c0_104, %c44] : memref<1x4x4x64xf32, #tpu.memory_space<vmem>>, vector<1x4x4x4xf32>
    %58 = vector.shape_cast %57 : vector<1x4x4x4xf32> to vector<4x4x4xf32>
    %59 = vector.shape_cast %56 : vector<4x4x4xf32> to vector<1x4x4x4xf32>
    tpu.vector_store %arg3[%c0_102, %c0_103, %c0_104, %c44], %59 {strides = array<i32>} : memref<1x4x4x64xf32, #tpu.memory_space<vmem>>, vector<1x4x4x4xf32>,
    %c0_105 = arith.constant 0 : index
    %c3_106 = arith.constant 3 : index
    %c0_107 = arith.constant 0 : index
    %c0_108 = arith.constant 0 : index
    %c0_109 = arith.constant 0 : index
    %c0_110 = arith.constant 0 : index
    %60 = vector.load %arg2[%c0_105, %c3_106, %c0_107, %c0_108, %c0_109, %c0_110] : memref<1x4x4x4x4x4xf32, #tpu.memory_space<vmem>>, vector<1x1x4x1x4x4xf32>
    %61 = vector.shape_cast %60 : vector<1x1x4x1x4x4xf32> to vector<4x4x4xf32>
    %c0_111 = arith.constant 0 : index
    %c0_112 = arith.constant 0 : index
    %c0_113 = arith.constant 0 : index
    %c48 = arith.constant 48 : index
    %62 = vector.load %arg3[%c0_111, %c0_112, %c0_113, %c48] : memref<1x4x4x64xf32, #tpu.memory_space<vmem>>, vector<1x4x4x4xf32>
    %63 = vector.shape_cast %62 : vector<1x4x4x4xf32> to vector<4x4x4xf32>
    %64 = vector.shape_cast %61 : vector<4x4x4xf32> to vector<1x4x4x4xf32>
    tpu.vector_store %arg3[%c0_111, %c0_112, %c0_113, %c48], %64 {strides = array<i32>} : memref<1x4x4x64xf32, #tpu.memory_space<vmem>>, vector<1x4x4x4xf32>,
    %c0_114 = arith.constant 0 : index
    %c3_115 = arith.constant 3 : index
    %c0_116 = arith.constant 0 : index
    %c1_117 = arith.constant 1 : index
    %c0_118 = arith.constant 0 : index
    %c0_119 = arith.constant 0 : index
    %65 = vector.load %arg2[%c0_114, %c3_115, %c0_116, %c1_117, %c0_118, %c0_119] : memref<1x4x4x4x4x4xf32, #tpu.memory_space<vmem>>, vector<1x1x4x1x4x4xf32>
    %66 = vector.shape_cast %65 : vector<1x1x4x1x4x4xf32> to vector<4x4x4xf32>
    %c0_120 = arith.constant 0 : index
    %c0_121 = arith.constant 0 : index
    %c0_122 = arith.constant 0 : index
    %c52 = arith.constant 52 : index
    %67 = vector.load %arg3[%c0_120, %c0_121, %c0_122, %c52] : memref<1x4x4x64xf32, #tpu.memory_space<vmem>>, vector<1x4x4x4xf32>
    %68 = vector.shape_cast %67 : vector<1x4x4x4xf32> to vector<4x4x4xf32>
    %69 = vector.shape_cast %66 : vector<4x4x4xf32> to vector<1x4x4x4xf32>
    tpu.vector_store %arg3[%c0_120, %c0_121, %c0_122, %c52], %69 {strides = array<i32>} : memref<1x4x4x64xf32, #tpu.memory_space<vmem>>, vector<1x4x4x4xf32>,
    %c0_123 = arith.constant 0 : index
    %c3_124 = arith.constant 3 : index
    %c0_125 = arith.constant 0 : index
    %c2_126 = arith.constant 2 : index
    %c0_127 = arith.constant 0 : index
    %c0_128 = arith.constant 0 : index
    %70 = vector.load %arg2[%c0_123, %c3_124, %c0_125, %c2_126, %c0_127, %c0_128] : memref<1x4x4x4x4x4xf32, #tpu.memory_space<vmem>>, vector<1x1x4x1x4x4xf32>
    %71 = vector.shape_cast %70 : vector<1x1x4x1x4x4xf32> to vector<4x4x4xf32>
    %c0_129 = arith.constant 0 : index
    %c0_130 = arith.constant 0 : index
    %c0_131 = arith.constant 0 : index
    %c56 = arith.constant 56 : index
    %72 = vector.load %arg3[%c0_129, %c0_130, %c0_131, %c56] : memref<1x4x4x64xf32, #tpu.memory_space<vmem>>, vector<1x4x4x4xf32>
    %73 = vector.shape_cast %72 : vector<1x4x4x4xf32> to vector<4x4x4xf32>
    %74 = vector.shape_cast %71 : vector<4x4x4xf32> to vector<1x4x4x4xf32>
    tpu.vector_store %arg3[%c0_129, %c0_130, %c0_131, %c56], %74 {strides = array<i32>} : memref<1x4x4x64xf32, #tpu.memory_space<vmem>>, vector<1x4x4x4xf32>,
    %c0_132 = arith.constant 0 : index
    %c3_133 = arith.constant 3 : index
    %c0_134 = arith.constant 0 : index
    %c3_135 = arith.constant 3 : index
    %c0_136 = arith.constant 0 : index
    %c0_137 = arith.constant 0 : index
    %75 = vector.load %arg2[%c0_132, %c3_133, %c0_134, %c3_135, %c0_136, %c0_137] : memref<1x4x4x4x4x4xf32, #tpu.memory_space<vmem>>, vector<1x1x4x1x4x4xf32>
    %76 = vector.shape_cast %75 : vector<1x1x4x1x4x4xf32> to vector<4x4x4xf32>
    %c0_138 = arith.constant 0 : index
    %c0_139 = arith.constant 0 : index
    %c0_140 = arith.constant 0 : index
    %c60 = arith.constant 60 : index
    %77 = vector.load %arg3[%c0_138, %c0_139, %c0_140, %c60] : memref<1x4x4x64xf32, #tpu.memory_space<vmem>>, vector<1x4x4x4xf32>
    %78 = vector.shape_cast %77 : vector<1x4x4x4xf32> to vector<4x4x4xf32>
    %79 = vector.shape_cast %76 : vector<4x4x4xf32> to vector<1x4x4x4xf32>
    tpu.vector_store %arg3[%c0_138, %c0_139, %c0_140, %c60], %79 {strides = array<i32>} : memref<1x4x4x64xf32, #tpu.memory_space<vmem>>, vector<1x4x4x4xf32>,
    return
  }
  func.func @transform_0(%arg0: i32, %arg1: i32) -> (i32, i32, i32, i32, i32, i32) {
    %c0_i32 = arith.constant 0 : i32
    %c0_i32_0 = arith.constant 0 : i32
    %c0_i32_1 = arith.constant 0 : i32
    %c0_i32_2 = arith.constant 0 : i32
    %c0_i32_3 = arith.constant 0 : i32
    return %arg0, %c0_i32, %arg1, %c0_i32_0, %c0_i32_1, %c0_i32_2 : i32, i32, i32, i32, i32, i32
  }
  func.func @transform_1(%arg0: i32, %arg1: i32) -> (i32, i32, i32, i32) {
    %c0_i32 = arith.constant 0 : i32
    %c0_i32_0 = arith.constant 0 : i32
    %c0_i32_1 = arith.constant 0 : i32
    return %arg0, %arg1, %c0_i32, %c0_i32_0 : i32, i32, i32, i32
  }
}

</mosaic_0001>

<llo_original>
// kernel: tpu_custom_call.1
$region0: #{tpu_custom_call.1}
  #allocation0 [shape = 'u32[]', space=smem, size = 0x4, offset = 0x4, fixed_abs, tag = 'smem constant byte address 0x4 - core index']
  #allocation1 [shape = 'u32[72,128]{1,0:T(1,128)}', space=vmem, size = 0x9000, scoped, tag = 'internal scratch']
  %s0 = inlined_call_operand.hbm [shape: f32[2,4,4,4,4,4], index: 0, kind: input, shape index: {}]
  %s1 = inlined_call_operand.hbm [shape: f32[2,4,4,64], index: 1, kind: output, shape index: {}]
  %s2 = sld [smem:[#allocation0]]
  $region41: #{tpu_custom_call.1} parent=0
    _
  %s4 = ssub.s32 1, %s2
  %s5 = scalar_select 0, %s4, %s2
  $region1: #{tpu_custom_call.1} parent=0
    #allocation2 [shape = 'u8[262144]{0}', space=vmem, size = 0x40000, scoped, tag = 'input window, operand 0']
    #allocation3 [shape = 's32[2]{0}', space=sflag, size = 0x8, scoped, tag = 'scoped memory for tpu_custom_call.1']
    #allocation4 [shape = 's32[2]{0}', space=sflag, size = 0x8, scoped, tag = 'scoped memory for tpu_custom_call.1']
    #allocation5 [shape = 'u8[16384]{0}', space=vmem, size = 0x4000, scoped, tag = 'output window, operand 0']
    %6 = vsyncpa [#allocation3], 0
    %s7 = scalar_lea.sflag [#allocation3], 1
    %8 = vsyncpa %s7, 0
    %9 = vsyncpa [#allocation4], 0
    %s10 = scalar_lea.sflag [#allocation4], 1
    %11 = vsyncpa %s10, 0
    loop: start=0, step=1, limit=4
    $region2: #{tpu_custom_call.1} parent=1 // loop_pre_header
      _
    $region3: #{tpu_custom_call.1} parent=1 // loop_header
      %s13 = sphi 0, %s17
      %p14 = scmp.ge.s32.totalorder %s13, 4
      %s20 = sphi 0, %s32
      %s21 = sphi 0, %s28
      %s22 = sphi 0, %s20
      %s23 = sphi 0, %s21
      %s24 = sphi 0, %s22
      %s25 = sphi 0, %s23
      %s37 = sphi 0, %s39
      %s40 = sphi 0, %s37
      %s41 = sphi 0, %s40
      %s57 = sphi 0, %s41
      %s65 = sphi 0, %s67
      %s68 = sphi 0, %s65
      %s69 = sphi 0, %s68
      %s85 = sphi 0, %s69
    $region4: #{tpu_custom_call.1} parent=1 // loop_header_branch
      %16 = sbr.rel (%p14) target = $region8
    $region5: #{tpu_custom_call.1} parent=1 // loop_body
      %s18 = ssub.s32 %s13, 1
      %s19 = ssub.s32 %s13, 2
      %s26 = sadd.s32 1, %s21
      %p27 = scmp.ge.s32.totalorder %s26, 1
      %s28 = scalar_select %p27, 0, %s26
      %s29 = sadd.s32 1, %s20
      %s30 = scalar_select %p27, %s29, %s20
      %p31 = scmp.ge.s32.totalorder %s30, 2
      %s32 = scalar_select %p31, 0, %s30
      %s33 = ssub.s32 %s20, %s32
      %s34 = ssub.s32 %s21, %s28
      %s35 = sor.u32 %s33, %s34
      %p36 = scmp.eq.s32.totalorder %s35, 0
      %s38 = sadd.s32 %s37, 1
      %s39 = scalar_select %p36, %s37, %s38
      %p42 = pneg %p36
      %p43 = scmp.eq.s32.totalorder %s13, 1
      %p44 = por %p42, %p43
      %p45 = scmp.ne.s32.totalorder %s37, %s40
      %p46 = scmp.eq.s32.totalorder %s13, 0
      %p47 = por %p45, %p46
      %p48 = scmp.ne.s32.totalorder %s37, %s40
      %p49 = scmp.eq.s32.totalorder %s18, 1
      %p50 = por %p48, %p49
      %p51 = scmp.ne.s32.totalorder %s40, %s41
      %p52 = scmp.eq.s32.totalorder %s18, 0
      %p53 = por %p51, %p52
      %p54 = scmp.ne.s32.totalorder %s40, %s41
      %p55 = scmp.eq.s32.totalorder %s19, 1
      %p56 = por %p54, %p55
      %p58 = scmp.ne.s32.totalorder %s41, %s57
      %p59 = scmp.eq.s32.totalorder %s19, 0
      %p60 = por %p58, %p59
      %s61 = ssub.s32 %s20, %s32
      %s62 = ssub.s32 %s21, %s28
      %s63 = sor.u32 %s61, %s62
      %p64 = scmp.eq.s32.totalorder %s63, 0
      %s66 = sadd.s32 %s65, 1
      %s67 = scalar_select %p64, %s65, %s66
      %p70 = pneg %p64
      %p71 = scmp.eq.s32.totalorder %s13, 1
      %p72 = por %p70, %p71
      %p73 = scmp.ne.s32.totalorder %s65, %s68
      %p74 = scmp.eq.s32.totalorder %s13, 0
      %p75 = por %p73, %p74
      %p76 = scmp.ne.s32.totalorder %s65, %s68
      %p77 = scmp.eq.s32.totalorder %s18, 1
      %p78 = por %p76, %p77
      %p79 = scmp.ne.s32.totalorder %s68, %s69
      %p80 = scmp.eq.s32.totalorder %s18, 0
      %p81 = por %p79, %p80
      %p82 = scmp.ne.s32.totalorder %s68, %s69
      %p83 = scmp.eq.s32.totalorder %s19, 1
      %p84 = por %p82, %p83
      %p86 = scmp.ne.s32.totalorder %s69, %s85
      %p87 = scmp.eq.s32.totalorder %s19, 0
      %p88 = por %p86, %p87
      %p89 = scmp.le.s32.totalorder 1, %s13
      %p90 = scmp.lt.s32.totalorder %s13, 3
      %p91 = pnand %p89, %p90
      %p92 = pneg %p91
      // Predicated region
      $region9: #{tpu_custom_call.1} parent=5 // pred_check
        _
      $region10: #{tpu_custom_call.1} parent=5 // pred_check_branch
        %94 = sbr.rel (%p91) target = $region12
      $region11: #{tpu_custom_call.1} parent=5 // pred_region
        %s95 = ssub.s32 %s13, 1
      $region12: #{tpu_custom_call.1} parent=5 // pred_fallthru
        _
      %p96 = scmp.lt.s32.totalorder %s13, 2
      // Predicated region
      $region13: #{tpu_custom_call.1} parent=5 // pred_check
        %p97 = pneg %p96
      $region14: #{tpu_custom_call.1} parent=5 // pred_check_branch
        %99 = sbr.rel (%p97) target = $region16
      $region15: #{tpu_custom_call.1} parent=5 // pred_region
        // Predicated region
        $region17: #{tpu_custom_call.1} parent=15 // pred_check
          %p100 = pneg %p47
        $region18: #{tpu_custom_call.1} parent=15 // pred_check_branch
          %102 = sbr.rel (%p100) target = $region20
        $region19: #{tpu_custom_call.1} parent=15 // pred_region
          %s103 = sand.u32 %s37, 1
          %s104 = scalar_lea.sflag [#allocation3], %s103
          %s105 = sand.u32 %s37, 1
          %s106 = smul.addr %s105, 256
          %s107 = scalar_lea.vmem [#allocation2], %s106
          %s108 = smul.u32 4, %s21
          %110 = vsyncadd %s104, 0
          %s111 = smul.addr %s108, 4
          %s112 = smul.addr %s20, 64
          %s113 = sadd.s32 %s111, %s112
          %s114 = smul.addr %s113, 4
          %s115 = scalar_lea.hbm %s0, %s114
          %s116 = sshll.u32 %s115, 4
          %s117 = int_to_ptr.hbm [resolvable:$true] %s116
          %s118 = sshll.u32 %s107, 4
          %s119 = int_to_ptr.vmem [resolvable:$true] %s118
          %124 = dma.hbm_to_vmem [thread:$0]  %s117, 4096, %s119, %s104, 64, 64, 4
        $region20: #{tpu_custom_call.1} parent=15 // pred_fallthru
          _
      $region16: #{tpu_custom_call.1} parent=5 // pred_fallthru
        _
      %p125 = scmp.le.s32.totalorder 1, %s13
      %p126 = scmp.lt.s32.totalorder %s13, 3
      %p127 = pnand %p125, %p126
      %p128 = pneg %p127
      // Predicated region
      $region21: #{tpu_custom_call.1} parent=5 // pred_check
        _
      $region22: #{tpu_custom_call.1} parent=5 // pred_check_branch
        %130 = sbr.rel (%p127) target = $region24
      $region23: #{tpu_custom_call.1} parent=5 // pred_region
        %s131 = ssub.s32 %s13, 1
        %s132 = sand.u32 %s40, 1
        %s133 = scalar_lea.sflag [#allocation3], %s132
        %s134 = sand.u32 %s40, 1
        %s135 = smul.addr %s134, 256
        %s136 = scalar_lea.vmem [#allocation2], %s135
        // Predicated region
        $region25: #{tpu_custom_call.1} parent=23 // pred_check
          %p137 = pneg %p53
        $region26: #{tpu_custom_call.1} parent=23 // pred_check_branch
          %139 = sbr.rel (%p137) target = $region28
        $region27: #{tpu_custom_call.1} parent=23 // pred_region
          %141 = dma.done %s133, 4096
        $region28: #{tpu_custom_call.1} parent=23 // pred_fallthru
          _
        %s142 = sand.u32 %s40, 1
        %s143 = scalar_lea.sflag [#allocation3], %s142
        %s144 = sand.u32 %s40, 1
        %s145 = smul.addr %s144, 256
        %s146 = scalar_lea.vmem [#allocation2], %s145
        %p147 = pneg %p53
        %p148 = pneg %p50
        %p149 = pneg %p81
        %p150 = pneg %p78
        %s151 = sand.u32 %s68, 1
        %s152 = scalar_lea.sflag [#allocation4], %s151
        %s153 = sand.u32 %s68, 1
        %s154 = smul.addr %s153, 16
        %s155 = scalar_lea.vmem [#allocation5], %s154
        %s156 = smul.u32 4, %s23
        %s157 = smul.u32 4, %s23
        %v158 = vld [vmem:[%s136] sm:$0xf]
        %v159 = vld [vmem:[%s136 + $0x10] sm:$0xf]
        %v160 = vld [vmem:[%s136 + $0x20] sm:$0xf]
        %v161 = vld [vmem:[%s136 + $0x30] sm:$0xf]
        %s162 = scalar_lea.vmem %s136, 4 [#allocation2]
        %v163 = vld [vmem:[%s162] sm:$0xf]
        %v164 = vld [vmem:[%s162 + $0x10] sm:$0xf]
        %v165 = vld [vmem:[%s162 + $0x20] sm:$0xf]
        %v166 = vld [vmem:[%s162 + $0x30] sm:$0xf]
        %s167 = scalar_lea.vmem %s136, 8 [#allocation2]
        %v168 = vld [vmem:[%s167] sm:$0xf]
        %v169 = vld [vmem:[%s167 + $0x10] sm:$0xf]
        %v170 = vld [vmem:[%s167 + $0x20] sm:$0xf]
        %v171 = vld [vmem:[%s167 + $0x30] sm:$0xf]
        %s172 = scalar_lea.vmem %s136, 12 [#allocation2]
        %v173 = vld [vmem:[%s172] sm:$0xf]
        %v174 = vld [vmem:[%s172 + $0x10] sm:$0xf]
        %v175 = vld [vmem:[%s172 + $0x20] sm:$0xf]
        %v176 = vld [vmem:[%s172 + $0x30] sm:$0xf]
        %s177 = scalar_lea.vmem %s136, 64 [#allocation2]
        %v178 = vld [vmem:[%s177] sm:$0xf]
        %v179 = vld [vmem:[%s177 + $0x10] sm:$0xf]
        %v180 = vld [vmem:[%s177 + $0x20] sm:$0xf]
        %v181 = vld [vmem:[%s177 + $0x30] sm:$0xf]
        %s182 = scalar_lea.vmem %s136, 68 [#allocation2]
        %v183 = vld [vmem:[%s182] sm:$0xf]
        %v184 = vld [vmem:[%s182 + $0x10] sm:$0xf]
        %v185 = vld [vmem:[%s182 + $0x20] sm:$0xf]
        %v186 = vld [vmem:[%s182 + $0x30] sm:$0xf]
        %s187 = scalar_lea.vmem %s136, 72 [#allocation2]
        %v188 = vld [vmem:[%s187] sm:$0xf]
        %v189 = vld [vmem:[%s187 + $0x10] sm:$0xf]
        %v190 = vld [vmem:[%s187 + $0x20] sm:$0xf]
        %v191 = vld [vmem:[%s187 + $0x30] sm:$0xf]
        %s192 = scalar_lea.vmem %s136, 76 [#allocation2]
        %v193 = vld [vmem:[%s192] sm:$0xf]
        %v194 = vld [vmem:[%s192 + $0x10] sm:$0xf]
        %v195 = vld [vmem:[%s192 + $0x20] sm:$0xf]
        %v196 = vld [vmem:[%s192 + $0x30] sm:$0xf]
        %s197 = scalar_lea.vmem %s136, 128 [#allocation2]
        %v198 = vld [vmem:[%s197] sm:$0xf]
        %v199 = vld [vmem:[%s197 + $0x10] sm:$0xf]
        %v200 = vld [vmem:[%s197 + $0x20] sm:$0xf]
        %v201 = vld [vmem:[%s197 + $0x30] sm:$0xf]
        %s202 = scalar_lea.vmem %s136, 132 [#allocation2]
        %v203 = vld [vmem:[%s202] sm:$0xf]
        %v204 = vld [vmem:[%s202 + $0x10] sm:$0xf]
        %v205 = vld [vmem:[%s202 + $0x20] sm:$0xf]
        %v206 = vld [vmem:[%s202 + $0x30] sm:$0xf]
        %s207 = scalar_lea.vmem %s136, 136 [#allocation2]
        %v208 = vld [vmem:[%s207] sm:$0xf]
        %v209 = vld [vmem:[%s207 + $0x10] sm:$0xf]
        %v210 = vld [vmem:[%s207 + $0x20] sm:$0xf]
        %v211 = vld [vmem:[%s207 + $0x30] sm:$0xf]
        %s212 = scalar_lea.vmem %s136, 140 [#allocation2]
        %v213 = vld [vmem:[%s212] sm:$0xf]
        %v214 = vld [vmem:[%s212 + $0x10] sm:$0xf]
        %v215 = vld [vmem:[%s212 + $0x20] sm:$0xf]
        %v216 = vld [vmem:[%s212 + $0x30] sm:$0xf]
        %s217 = scalar_lea.vmem %s136, 192 [#allocation2]
        %v218 = vld [vmem:[%s217] sm:$0xf]
        %v219 = vld [vmem:[%s217 + $0x10] sm:$0xf]
        %v220 = vld [vmem:[%s217 + $0x20] sm:$0xf]
        %v221 = vld [vmem:[%s217 + $0x30] sm:$0xf]
        %s222 = scalar_lea.vmem %s136, 196 [#allocation2]
        %v223 = vld [vmem:[%s222] sm:$0xf]
        %v224 = vld [vmem:[%s222 + $0x10] sm:$0xf]
        %v225 = vld [vmem:[%s222 + $0x20] sm:$0xf]
        %v226 = vld [vmem:[%s222 + $0x30] sm:$0xf]
        %s227 = scalar_lea.vmem %s136, 200 [#allocation2]
        %v228 = vld [vmem:[%s227] sm:$0xf]
        %v229 = vld [vmem:[%s227 + $0x10] sm:$0xf]
        %v230 = vld [vmem:[%s227 + $0x20] sm:$0xf]
        %v231 = vld [vmem:[%s227 + $0x30] sm:$0xf]
        %s232 = scalar_lea.vmem %s136, 204 [#allocation2]
        %v233 = vld [vmem:[%s232] sm:$0xf]
        %v234 = vld [vmem:[%s232 + $0x10] sm:$0xf]
        %v235 = vld [vmem:[%s232 + $0x20] sm:$0xf]
        %v236 = vld [vmem:[%s232 + $0x30] sm:$0xf]
        %241 = vrot.lane.b32.xlu0 %v163, 4
        %v242 = vpop.permute.xlu0 %241
        %243 = vrot.lane.b32.xlu0 %v164, 4
        %v244 = vpop.permute.xlu0 %243
        %245 = vrot.lane.b32.xlu0 %v165, 4
        %v246 = vpop.permute.xlu0 %245
        %247 = vrot.lane.b32.xlu0 %v166, 4
        %v248 = vpop.permute.xlu0 %247
        %257 = vrot.lane.b32.xlu0 %v168, 8
        %v258 = vpop.permute.xlu0 %257
        %259 = vrot.lane.b32.xlu0 %v169, 8
        %v260 = vpop.permute.xlu0 %259
        %261 = vrot.lane.b32.xlu0 %v170, 8
        %v262 = vpop.permute.xlu0 %261
        %263 = vrot.lane.b32.xlu0 %v171, 8
        %v264 = vpop.permute.xlu0 %263
        %273 = vrot.lane.b32.xlu0 %v173, 12
        %v274 = vpop.permute.xlu0 %273
        %275 = vrot.lane.b32.xlu0 %v174, 12
        %v276 = vpop.permute.xlu0 %275
        %277 = vrot.lane.b32.xlu0 %v175, 12
        %v278 = vpop.permute.xlu0 %277
        %279 = vrot.lane.b32.xlu0 %v176, 12
        %v280 = vpop.permute.xlu0 %279
        %289 = vrot.lane.b32.xlu0 %v178, 16
        %v290 = vpop.permute.xlu0 %289
        %291 = vrot.lane.b32.xlu0 %v179, 16
        %v292 = vpop.permute.xlu0 %291
        %293 = vrot.lane.b32.xlu0 %v180, 16
        %v294 = vpop.permute.xlu0 %293
        %295 = vrot.lane.b32.xlu0 %v181, 16
        %v296 = vpop.permute.xlu0 %295
        %305 = vrot.lane.b32.xlu0 %v183, 20
        %v306 = vpop.permute.xlu0 %305
        %307 = vrot.lane.b32.xlu0 %v184, 20
        %v308 = vpop.permute.xlu0 %307
        %309 = vrot.lane.b32.xlu0 %v185, 20
        %v310 = vpop.permute.xlu0 %309
        %311 = vrot.lane.b32.xlu0 %v186, 20
        %v312 = vpop.permute.xlu0 %311
        %321 = vrot.lane.b32.xlu0 %v188, 24
        %v322 = vpop.permute.xlu0 %321
        %323 = vrot.lane.b32.xlu0 %v189, 24
        %v324 = vpop.permute.xlu0 %323
        %325 = vrot.lane.b32.xlu0 %v190, 24
        %v326 = vpop.permute.xlu0 %325
        %327 = vrot.lane.b32.xlu0 %v191, 24
        %v328 = vpop.permute.xlu0 %327
        %337 = vrot.lane.b32.xlu0 %v193, 28
        %v338 = vpop.permute.xlu0 %337
        %339 = vrot.lane.b32.xlu0 %v194, 28
        %v340 = vpop.permute.xlu0 %339
        %341 = vrot.lane.b32.xlu0 %v195, 28
        %v342 = vpop.permute.xlu0 %341
        %343 = vrot.lane.b32.xlu0 %v196, 28
        %v344 = vpop.permute.xlu0 %343
        %353 = vrot.lane.b32.xlu0 %v198, 32
        %v354 = vpop.permute.xlu0 %353
        %355 = vrot.lane.b32.xlu0 %v199, 32
        %v356 = vpop.permute.xlu0 %355
        %357 = vrot.lane.b32.xlu0 %v200, 32
        %v358 = vpop.permute.xlu0 %357
        %359 = vrot.lane.b32.xlu0 %v201, 32
        %v360 = vpop.permute.xlu0 %359
        %369 = vrot.lane.b32.xlu0 %v203, 36
        %v370 = vpop.permute.xlu0 %369
        %371 = vrot.lane.b32.xlu0 %v204, 36
        %v372 = vpop.permute.xlu0 %371
        %373 = vrot.lane.b32.xlu0 %v205, 36
        %v374 = vpop.permute.xlu0 %373
        %375 = vrot.lane.b32.xlu0 %v206, 36
        %v376 = vpop.permute.xlu0 %375
        %385 = vrot.lane.b32.xlu0 %v208, 40
        %v386 = vpop.permute.xlu0 %385
        %387 = vrot.lane.b32.xlu0 %v209, 40
        %v388 = vpop.permute.xlu0 %387
        %389 = vrot.lane.b32.xlu0 %v210, 40
        %v390 = vpop.permute.xlu0 %389
        %391 = vrot.lane.b32.xlu0 %v211, 40
        %v392 = vpop.permute.xlu0 %391
        %401 = vrot.lane.b32.xlu0 %v213, 44
        %v402 = vpop.permute.xlu0 %401
        %403 = vrot.lane.b32.xlu0 %v214, 44
        %v404 = vpop.permute.xlu0 %403
        %405 = vrot.lane.b32.xlu0 %v215, 44
        %v406 = vpop.permute.xlu0 %405
        %407 = vrot.lane.b32.xlu0 %v216, 44
        %v408 = vpop.permute.xlu0 %407
        %417 = vrot.lane.b32.xlu0 %v218, 48
        %v418 = vpop.permute.xlu0 %417
        %419 = vrot.lane.b32.xlu0 %v219, 48
        %v420 = vpop.permute.xlu0 %419
        %421 = vrot.lane.b32.xlu0 %v220, 48
        %v422 = vpop.permute.xlu0 %421
        %423 = vrot.lane.b32.xlu0 %v221, 48
        %v424 = vpop.permute.xlu0 %423
        %433 = vrot.lane.b32.xlu0 %v223, 52
        %v434 = vpop.permute.xlu0 %433
        %435 = vrot.lane.b32.xlu0 %v224, 52
        %v436 = vpop.permute.xlu0 %435
        %437 = vrot.lane.b32.xlu0 %v225, 52
        %v438 = vpop.permute.xlu0 %437
        %439 = vrot.lane.b32.xlu0 %v226, 52
        %v440 = vpop.permute.xlu0 %439
        %449 = vrot.lane.b32.xlu0 %v228, 56
        %v450 = vpop.permute.xlu0 %449
        %451 = vrot.lane.b32.xlu0 %v229, 56
        %v452 = vpop.permute.xlu0 %451
        %453 = vrot.lane.b32.xlu0 %v230, 56
        %v454 = vpop.permute.xlu0 %453
        %455 = vrot.lane.b32.xlu0 %v231, 56
        %v456 = vpop.permute.xlu0 %455
        %465 = vrot.lane.b32.xlu0 %v233, 60
        %v466 = vpop.permute.xlu0 %465
        %467 = vrot.lane.b32.xlu0 %v234, 60
        %v468 = vpop.permute.xlu0 %467
        %469 = vrot.lane.b32.xlu0 %v235, 60
        %v470 = vpop.permute.xlu0 %469
        %471 = vrot.lane.b32.xlu0 %v236, 60
        %v472 = vpop.permute.xlu0 %471
        %vm477 = vcmask 31744
        %v478 = vsel %vm477, %v158, %v242
        %v479 = vsel %vm477, %v159, %v244
        %v480 = vsel %vm477, %v160, %v246
        %v481 = vsel %vm477, %v161, %v248
        %vm482 = vcmask 64512
        %v483 = vsel %vm482, %v478, %v258
        %v484 = vsel %vm482, %v479, %v260
        %v485 = vsel %vm482, %v480, %v262
        %v486 = vsel %vm482, %v481, %v264
        %vm487 = vcmask 97280
        %v488 = vsel %vm487, %v483, %v274
        %v489 = vsel %vm487, %v484, %v276
        %v490 = vsel %vm487, %v485, %v278
        %v491 = vsel %vm487, %v486, %v280
        %vm492 = vcmask 130048
        %v493 = vsel %vm492, %v488, %v290
        %v494 = vsel %vm492, %v489, %v292
        %v495 = vsel %vm492, %v490, %v294
        %v496 = vsel %vm492, %v491, %v296
        %vm497 = vcmask 162816
        %v498 = vsel %vm497, %v493, %v306
        %v499 = vsel %vm497, %v494, %v308
        %v500 = vsel %vm497, %v495, %v310
        %v501 = vsel %vm497, %v496, %v312
        %vm502 = vcmask 195584
        %v503 = vsel %vm502, %v498, %v322
        %v504 = vsel %vm502, %v499, %v324
        %v505 = vsel %vm502, %v500, %v326
        %v506 = vsel %vm502, %v501, %v328
        %vm507 = vcmask 228352
        %v508 = vsel %vm507, %v503, %v338
        %v509 = vsel %vm507, %v504, %v340
        %v510 = vsel %vm507, %v505, %v342
        %v511 = vsel %vm507, %v506, %v344
        %vm512 = vcmask 261120
        %v513 = vsel %vm512, %v508, %v354
        %v514 = vsel %vm512, %v509, %v356
        %v515 = vsel %vm512, %v510, %v358
        %v516 = vsel %vm512, %v511, %v360
        %vm517 = vcmask 293888
        %v518 = vsel %vm517, %v513, %v370
        %v519 = vsel %vm517, %v514, %v372
        %v520 = vsel %vm517, %v515, %v374
        %v521 = vsel %vm517, %v516, %v376
        %vm522 = vcmask 326656
        %v523 = vsel %vm522, %v518, %v386
        %v524 = vsel %vm522, %v519, %v388
        %v525 = vsel %vm522, %v520, %v390
        %v526 = vsel %vm522, %v521, %v392
        %vm527 = vcmask 359424
        %v528 = vsel %vm527, %v523, %v402
        %v529 = vsel %vm527, %v524, %v404
        %v530 = vsel %vm527, %v525, %v406
        %v531 = vsel %vm527, %v526, %v408
        %vm532 = vcmask 392192
        %v533 = vsel %vm532, %v528, %v418
        %v534 = vsel %vm532, %v529, %v420
        %v535 = vsel %vm532, %v530, %v422
        %v536 = vsel %vm532, %v531, %v424
        %vm537 = vcmask 424960
        %v538 = vsel %vm537, %v533, %v434
        %v539 = vsel %vm537, %v534, %v436
        %v540 = vsel %vm537, %v535, %v438
        %v541 = vsel %vm537, %v536, %v440
        %vm542 = vcmask 457728
        %v543 = vsel %vm542, %v538, %v450
        %v544 = vsel %vm542, %v539, %v452
        %v545 = vsel %vm542, %v540, %v454
        %v546 = vsel %vm542, %v541, %v456
        %vm547 = vcmask 490496
        %v548 = vsel %vm547, %v543, %v466
        %v549 = vsel %vm547, %v544, %v468
        %v550 = vsel %vm547, %v545, %v470
        %v551 = vsel %vm547, %v546, %v472
        %vm552 = vcmask 519168
        %553 = vst.msk [vmem:[%s155] sm:$0xf] %vm552, %v548
        %554 = vst.msk [vmem:[%s155 + $0x4] sm:$0xf] %vm552, %v549
        %555 = vst.msk [vmem:[%s155 + $0x8] sm:$0xf] %vm552, %v550
        %556 = vst.msk [vmem:[%s155 + $0xc] sm:$0xf] %vm552, %v551
        %s557 = sand.u32 %s68, 1
        %s558 = scalar_lea.sflag [#allocation4], %s557
        %s559 = sand.u32 %s68, 1
        %s560 = smul.addr %s559, 16
        %s561 = scalar_lea.vmem [#allocation5], %s560
        // Predicated region
        $region29: #{tpu_custom_call.1} parent=23 // pred_check
          %p562 = pneg %p78
        $region30: #{tpu_custom_call.1} parent=23 // pred_check_branch
          %564 = sbr.rel (%p562) target = $region32
        $region31: #{tpu_custom_call.1} parent=23 // pred_region
          %s565 = smul.u32 4, %s23
          %567 = vsyncadd %s558, 0
          %s568 = smul.addr %s22, 4
          %s569 = sadd.s32 %s565, %s568
          %s570 = smul.addr %s569, 4
          %s571 = scalar_lea.hbm %s1, %s570
          %s572 = sshll.u32 %s561, 4
          %s573 = int_to_ptr.vmem [resolvable:$true] %s572
          %s574 = sshll.u32 %s571, 4
          %s575 = int_to_ptr.hbm [resolvable:$true] %s574
          %580 = dma.vmem_to_hbm [thread:$0]  %s573, 256, %s575, %s558, 64, 64, 4
        $region32: #{tpu_custom_call.1} parent=23 // pred_fallthru
          _
      $region24: #{tpu_custom_call.1} parent=5 // pred_fallthru
        _
      %p581 = scmp.le.s32.totalorder 2, %s13
      // Predicated region
      $region33: #{tpu_custom_call.1} parent=5 // pred_check
        %p582 = pneg %p581
      $region34: #{tpu_custom_call.1} parent=5 // pred_check_branch
        %584 = sbr.rel (%p582) target = $region36
      $region35: #{tpu_custom_call.1} parent=5 // pred_region
        %s585 = ssub.s32 %s13, 2
        // Predicated region
        $region37: #{tpu_custom_call.1} parent=35 // pred_check
          %p586 = pneg %p84
        $region38: #{tpu_custom_call.1} parent=35 // pred_check_branch
          %588 = sbr.rel (%p586) target = $region40
        $region39: #{tpu_custom_call.1} parent=35 // pred_region
          %s589 = sand.u32 %s69, 1
          %s590 = scalar_lea.sflag [#allocation4], %s589
          %s591 = sand.u32 %s69, 1
          %s592 = smul.addr %s591, 16
          %s593 = scalar_lea.vmem [#allocation5], %s592
          %595 = dma.done %s590, 256
        $region40: #{tpu_custom_call.1} parent=35 // pred_fallthru
          _
      $region36: #{tpu_custom_call.1} parent=5 // pred_fallthru
        _
    $region6: #{tpu_custom_call.1} parent=1 // loop_footer
      %s17 = sadd.s32 1, %s13
    $region7: #{tpu_custom_call.1} parent=1 // loop_footer_branch
      %12 = sbr.rel target = $region3
    $region8: #{tpu_custom_call.1} parent=1 // loop_exit
      _
    %596 = vsyncpa [#allocation3], 1
    %s597 = scalar_lea.sflag [#allocation3], 1
    %598 = vsyncpa %s597, 1
    %599 = vsyncpa [#allocation4], 1
    %s600 = scalar_lea.sflag [#allocation4], 1
    %601 = vsyncpa %s600, 1

// kernel: tpu_custom_call.1
$region0: #{tpu_custom_call.1}
  #allocation0 [shape = 'u32[]', space=smem, size = 0x4, offset = 0x4, fixed_abs, tag = 'smem constant byte address 0x4 - core index']
  #allocation1 [shape = 'u32[72,128]{1,0:T(1,128)}', space=vmem, size = 0x9000, scoped, tag = 'internal scratch']
  %s0 = inlined_call_operand.hbm [shape: f32[2,4,4,4,4,4], index: 0, kind: input, shape index: {}]
  %s1 = inlined_call_operand.hbm [shape: f32[2,4,4,64], index: 1, kind: output, shape index: {}]
  %s2 = sld [smem:[#allocation0]]
  $region41: #{tpu_custom_call.1} parent=0
    _
  %s4 = ssub.s32 1, %s2
  %s5 = scalar_select 0, %s4, %s2
  $region1: #{tpu_custom_call.1} parent=0
    #allocation2 [shape = 'u8[262144]{0}', space=vmem, size = 0x40000, scoped, tag = 'input window, operand 0']
    #allocation3 [shape = 's32[2]{0}', space=sflag, size = 0x8, scoped, tag = 'scoped memory for tpu_custom_call.1']
    #allocation4 [shape = 's32[2]{0}', space=sflag, size = 0x8, scoped, tag = 'scoped memory for tpu_custom_call.1']
    #allocation5 [shape = 'u8[16384]{0}', space=vmem, size = 0x4000, scoped, tag = 'output window, operand 0']
    %6 = vsyncpa [#allocation3], 0
    %s7 = scalar_lea.sflag [#allocation3], 1
    %8 = vsyncpa %s7, 0
    %9 = vsyncpa [#allocation4], 0
    %s10 = scalar_lea.sflag [#allocation4], 1
    %11 = vsyncpa %s10, 0
    loop: start=0, step=1, limit=4
    $region2: #{tpu_custom_call.1} parent=1 // loop_pre_header
      _
    $region3: #{tpu_custom_call.1} parent=1 // loop_header
      %s13 = sphi 0, %s17
      %p14 = scmp.ge.s32.totalorder %s13, 4
      %s20 = sphi 0, %s32
      %s21 = sphi 0, %s28
      %s22 = sphi 0, %s20
      %s23 = sphi 0, %s21
      %s24 = sphi 0, %s22
      %s25 = sphi 0, %s23
      %s37 = sphi 0, %s39
      %s40 = sphi 0, %s37
      %s41 = sphi 0, %s40
      %s57 = sphi 0, %s41
      %s65 = sphi 0, %s67
      %s68 = sphi 0, %s65
      %s69 = sphi 0, %s68
      %s85 = sphi 0, %s69
    $region4: #{tpu_custom_call.1} parent=1 // loop_header_branch
      %16 = sbr.rel (%p14) target = $region8
    $region5: #{tpu_custom_call.1} parent=1 // loop_body
      %s18 = ssub.s32 %s13, 1
      %s19 = ssub.s32 %s13, 2
      %s26 = sadd.s32 1, %s21
      %p27 = scmp.ge.s32.totalorder %s26, 1
      %s28 = scalar_select %p27, 0, %s26
      %s29 = sadd.s32 1, %s20
      %s30 = scalar_select %p27, %s29, %s20
      %p31 = scmp.ge.s32.totalorder %s30, 2
      %s32 = scalar_select %p31, 0, %s30
      %s33 = ssub.s32 %s20, %s32
      %s34 = ssub.s32 %s21, %s28
      %s35 = sor.u32 %s33, %s34
      %p36 = scmp.eq.s32.totalorder %s35, 0
      %s38 = sadd.s32 %s37, 1
      %s39 = scalar_select %p36, %s37, %s38
      %p42 = pneg %p36
      %p43 = scmp.eq.s32.totalorder %s13, 1
      %p44 = por %p42, %p43
      %p45 = scmp.ne.s32.totalorder %s37, %s40
      %p46 = scmp.eq.s32.totalorder %s13, 0
      %p47 = por %p45, %p46
      %p48 = scmp.ne.s32.totalorder %s37, %s40
      %p49 = scmp.eq.s32.totalorder %s18, 1
      %p50 = por %p48, %p49
      %p51 = scmp.ne.s32.totalorder %s40, %s41
      %p52 = scmp.eq.s32.totalorder %s18, 0
      %p53 = por %p51, %p52
      %p54 = scmp.ne.s32.totalorder %s40, %s41
      %p55 = scmp.eq.s32.totalorder %s19, 1
      %p56 = por %p54, %p55
      %p58 = scmp.ne.s32.totalorder %s41, %s57
      %p59 = scmp.eq.s32.totalorder %s19, 0
      %p60 = por %p58, %p59
      %s61 = ssub.s32 %s20, %s32
      %s62 = ssub.s32 %s21, %s28
      %s63 = sor.u32 %s61, %s62
      %p64 = scmp.eq.s32.totalorder %s63, 0
      %s66 = sadd.s32 %s65, 1
      %s67 = scalar_select %p64, %s65, %s66
      %p70 = pneg %p64
      %p71 = scmp.eq.s32.totalorder %s13, 1
      %p72 = por %p70, %p71
      %p73 = scmp.ne.s32.totalorder %s65, %s68
      %p74 = scmp.eq.s32.totalorder %s13, 0
      %p75 = por %p73, %p74
      %p76 = scmp.ne.s32.totalorder %s65, %s68
      %p77 = scmp.eq.s32.totalorder %s18, 1
      %p78 = por %p76, %p77
      %p79 = scmp.ne.s32.totalorder %s68, %s69
      %p80 = scmp.eq.s32.totalorder %s18, 0
      %p81 = por %p79, %p80
      %p82 = scmp.ne.s32.totalorder %s68, %s69
      %p83 = scmp.eq.s32.totalorder %s19, 1
      %p84 = por %p82, %p83
      %p86 = scmp.ne.s32.totalorder %s69, %s85
      %p87 = scmp.eq.s32.totalorder %s19, 0
      %p88 = por %p86, %p87
      %p89 = scmp.le.s32.totalorder 1, %s13
      %p90 = scmp.lt.s32.totalorder %s13, 3
      %p91 = pnand %p89, %p90
      %p92 = pneg %p91
      // Predicated region
      $region9: #{tpu_custom_call.1} parent=5 // pred_check
        _
      $region10: #{tpu_custom_call.1} parent=5 // pred_check_branch
        %94 = sbr.rel (%p91) target = $region12
      $region11: #{tpu_custom_call.1} parent=5 // pred_region
        %s95 = ssub.s32 %s13, 1
      $region12: #{tpu_custom_call.1} parent=5 // pred_fallthru
        _
      %p96 = scmp.lt.s32.totalorder %s13, 2
      // Predicated region
      $region13: #{tpu_custom_call.1} parent=5 // pred_check
        %p97 = pneg %p96
      $region14: #{tpu_custom_call.1} parent=5 // pred_check_branch
        %99 = sbr.rel (%p97) target = $region16
      $region15: #{tpu_custom_call.1} parent=5 // pred_region
        // Predicated region
        $region17: #{tpu_custom_call.1} parent=15 // pred_check
          %p100 = pneg %p47
        $region18: #{tpu_custom_call.1} parent=15 // pred_check_branch
          %102 = sbr.rel (%p100) target = $region20
        $region19: #{tpu_custom_call.1} parent=15 // pred_region
          %s103 = sand.u32 %s37, 1
          %s104 = scalar_lea.sflag [#allocation3], %s103
          %s105 = sand.u32 %s37, 1
          %s106 = smul.addr %s105, 256
          %s107 = scalar_lea.vmem [#allocation2], %s106
          %s108 = smul.u32 4, %s21
          %110 = vsyncadd %s104, 0
          %s111 = smul.addr %s108, 4
          %s112 = smul.addr %s20, 64
          %s113 = sadd.s32 %s111, %s112
          %s114 = smul.addr %s113, 4
          %s115 = scalar_lea.hbm %s0, %s114
          %s116 = sshll.u32 %s115, 4
          %s117 = int_to_ptr.hbm [resolvable:$true] %s116
          %s118 = sshll.u32 %s107, 4
          %s119 = int_to_ptr.vmem [resolvable:$true] %s118
          %124 = dma.hbm_to_vmem [thread:$0]  %s117, 4096, %s119, %s104, 64, 64, 4
        $region20: #{tpu_custom_call.1} parent=15 // pred_fallthru
          _
      $region16: #{tpu_custom_call.1} parent=5 // pred_fallthru
        _
      %p125 = scmp.le.s32.totalorder 1, %s13
      %p126 = scmp.lt.s32.totalorder %s13, 3
      %p127 = pnand %p125, %p126
      %p128 = pneg %p127
      // Predicated region
      $region21: #{tpu_custom_call.1} parent=5 // pred_check
        _
      $region22: #{tpu_custom_call.1} parent=5 // pred_check_branch
        %130 = sbr.rel (%p127) target = $region24
      $region23: #{tpu_custom_call.1} parent=5 // pred_region
        %s131 = ssub.s32 %s13, 1
        %s132 = sand.u32 %s40, 1
        %s133 = scalar_lea.sflag [#allocation3], %s132
        %s134 = sand.u32 %s40, 1
        %s135 = smul.addr %s134, 256
        %s136 = scalar_lea.vmem [#allocation2], %s135
        // Predicated region
        $region25: #{tpu_custom_call.1} parent=23 // pred_check
          %p137 = pneg %p53
        $region26: #{tpu_custom_call.1} parent=23 // pred_check_branch
          %139 = sbr.rel (%p137) target = $region28
        $region27: #{tpu_custom_call.1} parent=23 // pred_region
          %141 = dma.done %s133, 4096
        $region28: #{tpu_custom_call.1} parent=23 // pred_fallthru
          _
        %s142 = sand.u32 %s40, 1
        %s143 = scalar_lea.sflag [#allocation3], %s142
        %s144 = sand.u32 %s40, 1
        %s145 = smul.addr %s144, 256
        %s146 = scalar_lea.vmem [#allocation2], %s145
        %p147 = pneg %p53
        %p148 = pneg %p50
        %p149 = pneg %p81
        %p150 = pneg %p78
        %s151 = sand.u32 %s68, 1
        %s152 = scalar_lea.sflag [#allocation4], %s151
        %s153 = sand.u32 %s68, 1
        %s154 = smul.addr %s153, 16
        %s155 = scalar_lea.vmem [#allocation5], %s154
        %s156 = smul.u32 4, %s23
        %s157 = smul.u32 4, %s23
        %v158 = vld [vmem:[%s136] sm:$0xf]
        %v159 = vld [vmem:[%s136 + $0x10] sm:$0xf]
        %v160 = vld [vmem:[%s136 + $0x20] sm:$0xf]
        %v161 = vld [vmem:[%s136 + $0x30] sm:$0xf]
        %vm162 = vcmask 27648
        %163 = vst.msk [vmem:[%s155] sm:$0xf] %vm162, %v158
        %164 = vst.msk [vmem:[%s155 + $0x4] sm:$0xf] %vm162, %v159
        %165 = vst.msk [vmem:[%s155 + $0x8] sm:$0xf] %vm162, %v160
        %166 = vst.msk [vmem:[%s155 + $0xc] sm:$0xf] %vm162, %v161
        %s167 = scalar_lea.vmem %s136, 4 [#allocation2]
        %v168 = vld [vmem:[%s167] sm:$0xf]
        %v169 = vld [vmem:[%s167 + $0x10] sm:$0xf]
        %v170 = vld [vmem:[%s167 + $0x20] sm:$0xf]
        %v171 = vld [vmem:[%s167 + $0x30] sm:$0xf]
        %176 = vrot.lane.b32.xlu0 %v168, 4
        %v177 = vpop.permute.xlu0 %176
        %178 = vrot.lane.b32.xlu0 %v169, 4
        %v179 = vpop.permute.xlu0 %178
        %180 = vrot.lane.b32.xlu0 %v170, 4
        %v181 = vpop.permute.xlu0 %180
        %182 = vrot.lane.b32.xlu0 %v171, 4
        %v183 = vpop.permute.xlu0 %182
        %vm188 = vcmask 60448
        %189 = vst.msk [vmem:[%s155] sm:$0xf] %vm188, %v177
        %190 = vst.msk [vmem:[%s155 + $0x4] sm:$0xf] %vm188, %v179
        %191 = vst.msk [vmem:[%s155 + $0x8] sm:$0xf] %vm188, %v181
        %192 = vst.msk [vmem:[%s155 + $0xc] sm:$0xf] %vm188, %v183
        %s193 = scalar_lea.vmem %s136, 8 [#allocation2]
        %v194 = vld [vmem:[%s193] sm:$0xf]
        %v195 = vld [vmem:[%s193 + $0x10] sm:$0xf]
        %v196 = vld [vmem:[%s193 + $0x20] sm:$0xf]
        %v197 = vld [vmem:[%s193 + $0x30] sm:$0xf]
        %202 = vrot.lane.b32.xlu0 %v194, 8
        %v203 = vpop.permute.xlu0 %202
        %204 = vrot.lane.b32.xlu0 %v195, 8
        %v205 = vpop.permute.xlu0 %204
        %206 = vrot.lane.b32.xlu0 %v196, 8
        %v207 = vpop.permute.xlu0 %206
        %208 = vrot.lane.b32.xlu0 %v197, 8
        %v209 = vpop.permute.xlu0 %208
        %vm214 = vcmask 93248
        %215 = vst.msk [vmem:[%s155] sm:$0xf] %vm214, %v203
        %216 = vst.msk [vmem:[%s155 + $0x4] sm:$0xf] %vm214, %v205
        %217 = vst.msk [vmem:[%s155 + $0x8] sm:$0xf] %vm214, %v207
        %218 = vst.msk [vmem:[%s155 + $0xc] sm:$0xf] %vm214, %v209
        %s219 = scalar_lea.vmem %s136, 12 [#allocation2]
        %v220 = vld [vmem:[%s219] sm:$0xf]
        %v221 = vld [vmem:[%s219 + $0x10] sm:$0xf]
        %v222 = vld [vmem:[%s219 + $0x20] sm:$0xf]
        %v223 = vld [vmem:[%s219 + $0x30] sm:$0xf]
        %228 = vrot.lane.b32.xlu0 %v220, 12
        %v229 = vpop.permute.xlu0 %228
        %230 = vrot.lane.b32.xlu0 %v221, 12
        %v231 = vpop.permute.xlu0 %230
        %232 = vrot.lane.b32.xlu0 %v222, 12
        %v233 = vpop.permute.xlu0 %232
        %234 = vrot.lane.b32.xlu0 %v223, 12
        %v235 = vpop.permute.xlu0 %234
        %vm240 = vcmask 126048
        %241 = vst.msk [vmem:[%s155] sm:$0xf] %vm240, %v229
        %242 = vst.msk [vmem:[%s155 + $0x4] sm:$0xf] %vm240, %v231
        %243 = vst.msk [vmem:[%s155 + $0x8] sm:$0xf] %vm240, %v233
        %244 = vst.msk [vmem:[%s155 + $0xc] sm:$0xf] %vm240, %v235
        %s245 = scalar_lea.vmem %s136, 64 [#allocation2]
        %v246 = vld [vmem:[%s245] sm:$0xf]
        %v247 = vld [vmem:[%s245 + $0x10] sm:$0xf]
        %v248 = vld [vmem:[%s245 + $0x20] sm:$0xf]
        %v249 = vld [vmem:[%s245 + $0x30] sm:$0xf]
        %254 = vrot.lane.b32.xlu0 %v246, 16
        %v255 = vpop.permute.xlu0 %254
        %256 = vrot.lane.b32.xlu0 %v247, 16
        %v257 = vpop.permute.xlu0 %256
        %258 = vrot.lane.b32.xlu0 %v248, 16
        %v259 = vpop.permute.xlu0 %258
        %260 = vrot.lane.b32.xlu0 %v249, 16
        %v261 = vpop.permute.xlu0 %260
        %vm266 = vcmask 158848
        %267 = vst.msk [vmem:[%s155] sm:$0xf] %vm266, %v255
        %268 = vst.msk [vmem:[%s155 + $0x4] sm:$0xf] %vm266, %v257
        %269 = vst.msk [vmem:[%s155 + $0x8] sm:$0xf] %vm266, %v259
        %270 = vst.msk [vmem:[%s155 + $0xc] sm:$0xf] %vm266, %v261
        %s271 = scalar_lea.vmem %s136, 68 [#allocation2]
        %v272 = vld [vmem:[%s271] sm:$0xf]
        %v273 = vld [vmem:[%s271 + $0x10] sm:$0xf]
        %v274 = vld [vmem:[%s271 + $0x20] sm:$0xf]
        %v275 = vld [vmem:[%s271 + $0x30] sm:$0xf]
        %280 = vrot.lane.b32.xlu0 %v272, 20
        %v281 = vpop.permute.xlu0 %280
        %282 = vrot.lane.b32.xlu0 %v273, 20
        %v283 = vpop.permute.xlu0 %282
        %284 = vrot.lane.b32.xlu0 %v274, 20
        %v285 = vpop.permute.xlu0 %284
        %286 = vrot.lane.b32.xlu0 %v275, 20
        %v287 = vpop.permute.xlu0 %286
        %vm292 = vcmask 191648
        %293 = vst.msk [vmem:[%s155] sm:$0xf] %vm292, %v281
        %294 = vst.msk [vmem:[%s155 + $0x4] sm:$0xf] %vm292, %v283
        %295 = vst.msk [vmem:[%s155 + $0x8] sm:$0xf] %vm292, %v285
        %296 = vst.msk [vmem:[%s155 + $0xc] sm:$0xf] %vm292, %v287
        %s297 = scalar_lea.vmem %s136, 72 [#allocation2]
        %v298 = vld [vmem:[%s297] sm:$0xf]
        %v299 = vld [vmem:[%s297 + $0x10] sm:$0xf]
        %v300 = vld [vmem:[%s297 + $0x20] sm:$0xf]
        %v301 = vld [vmem:[%s297 + $0x30] sm:$0xf]
        %306 = vrot.lane.b32.xlu0 %v298, 24
        %v307 = vpop.permute.xlu0 %306
        %308 = vrot.lane.b32.xlu0 %v299, 24
        %v309 = vpop.permute.xlu0 %308
        %310 = vrot.lane.b32.xlu0 %v300, 24
        %v311 = vpop.permute.xlu0 %310
        %312 = vrot.lane.b32.xlu0 %v301, 24
        %v313 = vpop.permute.xlu0 %312
        %vm318 = vcmask 224448
        %319 = vst.msk [vmem:[%s155] sm:$0xf] %vm318, %v307
        %320 = vst.msk [vmem:[%s155 + $0x4] sm:$0xf] %vm318, %v309
        %321 = vst.msk [vmem:[%s155 + $0x8] sm:$0xf] %vm318, %v311
        %322 = vst.msk [vmem:[%s155 + $0xc] sm:$0xf] %vm318, %v313
        %s323 = scalar_lea.vmem %s136, 76 [#allocation2]
        %v324 = vld [vmem:[%s323] sm:$0xf]
        %v325 = vld [vmem:[%s323 + $0x10] sm:$0xf]
        %v326 = vld [vmem:[%s323 + $0x20] sm:$0xf]
        %v327 = vld [vmem:[%s323 + $0x30] sm:$0xf]
        %332 = vrot.lane.b32.xlu0 %v324, 28
        %v333 = vpop.permute.xlu0 %332
        %334 = vrot.lane.b32.xlu0 %v325, 28
        %v335 = vpop.permute.xlu0 %334
        %336 = vrot.lane.b32.xlu0 %v326, 28
        %v337 = vpop.permute.xlu0 %336
        %338 = vrot.lane.b32.xlu0 %v327, 28
        %v339 = vpop.permute.xlu0 %338
        %vm344 = vcmask 257248
        %345 = vst.msk [vmem:[%s155] sm:$0xf] %vm344, %v333
        %346 = vst.msk [vmem:[%s155 + $0x4] sm:$0xf] %vm344, %v335
        %347 = vst.msk [vmem:[%s155 + $0x8] sm:$0xf] %vm344, %v337
        %348 = vst.msk [vmem:[%s155 + $0xc] sm:$0xf] %vm344, %v339
        %s349 = scalar_lea.vmem %s136, 128 [#allocation2]
        %v350 = vld [vmem:[%s349] sm:$0xf]
        %v351 = vld [vmem:[%s349 + $0x10] sm:$0xf]
        %v352 = vld [vmem:[%s349 + $0x20] sm:$0xf]
        %v353 = vld [vmem:[%s349 + $0x30] sm:$0xf]
        %358 = vrot.lane.b32.xlu0 %v350, 32
        %v359 = vpop.permute.xlu0 %358
        %360 = vrot.lane.b32.xlu0 %v351, 32
        %v361 = vpop.permute.xlu0 %360
        %362 = vrot.lane.b32.xlu0 %v352, 32
        %v363 = vpop.permute.xlu0 %362
        %364 = vrot.lane.b32.xlu0 %v353, 32
        %v365 = vpop.permute.xlu0 %364
        %vm370 = vcmask 290048
        %371 = vst.msk [vmem:[%s155] sm:$0xf] %vm370, %v359
        %372 = vst.msk [vmem:[%s155 + $0x4] sm:$0xf] %vm370, %v361
        %373 = vst.msk [vmem:[%s155 + $0x8] sm:$0xf] %vm370, %v363
        %374 = vst.msk [vmem:[%s155 + $0xc] sm:$0xf] %vm370, %v365
        %s375 = scalar_lea.vmem %s136, 132 [#allocation2]
        %v376 = vld [vmem:[%s375] sm:$0xf]
        %v377 = vld [vmem:[%s375 + $0x10] sm:$0xf]
        %v378 = vld [vmem:[%s375 + $0x20] sm:$0xf]
        %v379 = vld [vmem:[%s375 + $0x30] sm:$0xf]
        %384 = vrot.lane.b32.xlu0 %v376, 36
        %v385 = vpop.permute.xlu0 %384
        %386 = vrot.lane.b32.xlu0 %v377, 36
        %v387 = vpop.permute.xlu0 %386
        %388 = vrot.lane.b32.xlu0 %v378, 36
        %v389 = vpop.permute.xlu0 %388
        %390 = vrot.lane.b32.xlu0 %v379, 36
        %v391 = vpop.permute.xlu0 %390
        %vm396 = vcmask 322848
        %397 = vst.msk [vmem:[%s155] sm:$0xf] %vm396, %v385
        %398 = vst.msk [vmem:[%s155 + $0x4] sm:$0xf] %vm396, %v387
        %399 = vst.msk [vmem:[%s155 + $0x8] sm:$0xf] %vm396, %v389
        %400 = vst.msk [vmem:[%s155 + $0xc] sm:$0xf] %vm396, %v391
        %s401 = scalar_lea.vmem %s136, 136 [#allocation2]
        %v402 = vld [vmem:[%s401] sm:$0xf]
        %v403 = vld [vmem:[%s401 + $0x10] sm:$0xf]
        %v404 = vld [vmem:[%s401 + $0x20] sm:$0xf]
        %v405 = vld [vmem:[%s401 + $0x30] sm:$0xf]
        %410 = vrot.lane.b32.xlu0 %v402, 40
        %v411 = vpop.permute.xlu0 %410
        %412 = vrot.lane.b32.xlu0 %v403, 40
        %v413 = vpop.permute.xlu0 %412
        %414 = vrot.lane.b32.xlu0 %v404, 40
        %v415 = vpop.permute.xlu0 %414
        %416 = vrot.lane.b32.xlu0 %v405, 40
        %v417 = vpop.permute.xlu0 %416
        %vm422 = vcmask 355648
        %423 = vst.msk [vmem:[%s155] sm:$0xf] %vm422, %v411
        %424 = vst.msk [vmem:[%s155 + $0x4] sm:$0xf] %vm422, %v413
        %425 = vst.msk [vmem:[%s155 + $0x8] sm:$0xf] %vm422, %v415
        %426 = vst.msk [vmem:[%s155 + $0xc] sm:$0xf] %vm422, %v417
        %s427 = scalar_lea.vmem %s136, 140 [#allocation2]
        %v428 = vld [vmem:[%s427] sm:$0xf]
        %v429 = vld [vmem:[%s427 + $0x10] sm:$0xf]
        %v430 = vld [vmem:[%s427 + $0x20] sm:$0xf]
        %v431 = vld [vmem:[%s427 + $0x30] sm:$0xf]
        %436 = vrot.lane.b32.xlu0 %v428, 44
        %v437 = vpop.permute.xlu0 %436
        %438 = vrot.lane.b32.xlu0 %v429, 44
        %v439 = vpop.permute.xlu0 %438
        %440 = vrot.lane.b32.xlu0 %v430, 44
        %v441 = vpop.permute.xlu0 %440
        %442 = vrot.lane.b32.xlu0 %v431, 44
        %v443 = vpop.permute.xlu0 %442
        %vm448 = vcmask 388448
        %449 = vst.msk [vmem:[%s155] sm:$0xf] %vm448, %v437
        %450 = vst.msk [vmem:[%s155 + $0x4] sm:$0xf] %vm448, %v439
        %451 = vst.msk [vmem:[%s155 + $0x8] sm:$0xf] %vm448, %v441
        %452 = vst.msk [vmem:[%s155 + $0xc] sm:$0xf] %vm448, %v443
        %s453 = scalar_lea.vmem %s136, 192 [#allocation2]
        %v454 = vld [vmem:[%s453] sm:$0xf]
        %v455 = vld [vmem:[%s453 + $0x10] sm:$0xf]
        %v456 = vld [vmem:[%s453 + $0x20] sm:$0xf]
        %v457 = vld [vmem:[%s453 + $0x30] sm:$0xf]
        %462 = vrot.lane.b32.xlu0 %v454, 48
        %v463 = vpop.permute.xlu0 %462
        %464 = vrot.lane.b32.xlu0 %v455, 48
        %v465 = vpop.permute.xlu0 %464
        %466 = vrot.lane.b32.xlu0 %v456, 48
        %v467 = vpop.permute.xlu0 %466
        %468 = vrot.lane.b32.xlu0 %v457, 48
        %v469 = vpop.permute.xlu0 %468
        %vm474 = vcmask 421248
        %475 = vst.msk [vmem:[%s155] sm:$0xf] %vm474, %v463
        %476 = vst.msk [vmem:[%s155 + $0x4] sm:$0xf] %vm474, %v465
        %477 = vst.msk [vmem:[%s155 + $0x8] sm:$0xf] %vm474, %v467
        %478 = vst.msk [vmem:[%s155 + $0xc] sm:$0xf] %vm474, %v469
        %s479 = scalar_lea.vmem %s136, 196 [#allocation2]
        %v480 = vld [vmem:[%s479] sm:$0xf]
        %v481 = vld [vmem:[%s479 + $0x10] sm:$0xf]
        %v482 = vld [vmem:[%s479 + $0x20] sm:$0xf]
        %v483 = vld [vmem:[%s479 + $0x30] sm:$0xf]
        %488 = vrot.lane.b32.xlu0 %v480, 52
        %v489 = vpop.permute.xlu0 %488
        %490 = vrot.lane.b32.xlu0 %v481, 52
        %v491 = vpop.permute.xlu0 %490
        %492 = vrot.lane.b32.xlu0 %v482, 52
        %v493 = vpop.permute.xlu0 %492
        %494 = vrot.lane.b32.xlu0 %v483, 52
        %v495 = vpop.permute.xlu0 %494
        %vm500 = vcmask 454048
        %501 = vst.msk [vmem:[%s155] sm:$0xf] %vm500, %v489
        %502 = vst.msk [vmem:[%s155 + $0x4] sm:$0xf] %vm500, %v491
        %503 = vst.msk [vmem:[%s155 + $0x8] sm:$0xf] %vm500, %v493
        %504 = vst.msk [vmem:[%s155 + $0xc] sm:$0xf] %vm500, %v495
        %s505 = scalar_lea.vmem %s136, 200 [#allocation2]
        %v506 = vld [vmem:[%s505] sm:$0xf]
        %v507 = vld [vmem:[%s505 + $0x10] sm:$0xf]
        %v508 = vld [vmem:[%s505 + $0x20] sm:$0xf]
        %v509 = vld [vmem:[%s505 + $0x30] sm:$0xf]
        %514 = vrot.lane.b32.xlu0 %v506, 56
        %v515 = vpop.permute.xlu0 %514
        %516 = vrot.lane.b32.xlu0 %v507, 56
        %v517 = vpop.permute.xlu0 %516
        %518 = vrot.lane.b32.xlu0 %v508, 56
        %v519 = vpop.permute.xlu0 %518
        %520 = vrot.lane.b32.xlu0 %v509, 56
        %v521 = vpop.permute.xlu0 %520
        %vm526 = vcmask 486848
        %527 = vst.msk [vmem:[%s155] sm:$0xf] %vm526, %v515
        %528 = vst.msk [vmem:[%s155 + $0x4] sm:$0xf] %vm526, %v517
        %529 = vst.msk [vmem:[%s155 + $0x8] sm:$0xf] %vm526, %v519
        %530 = vst.msk [vmem:[%s155 + $0xc] sm:$0xf] %vm526, %v521
        %s531 = scalar_lea.vmem %s136, 204 [#allocation2]
        %v532 = vld [vmem:[%s531] sm:$0xf]
        %v533 = vld [vmem:[%s531 + $0x10] sm:$0xf]
        %v534 = vld [vmem:[%s531 + $0x20] sm:$0xf]
        %v535 = vld [vmem:[%s531 + $0x30] sm:$0xf]
        %540 = vrot.lane.b32.xlu0 %v532, 60
        %v541 = vpop.permute.xlu0 %540
        %542 = vrot.lane.b32.xlu0 %v533, 60
        %v543 = vpop.permute.xlu0 %542
        %544 = vrot.lane.b32.xlu0 %v534, 60
        %v545 = vpop.permute.xlu0 %544
        %546 = vrot.lane.b32.xlu0 %v535, 60
        %v547 = vpop.permute.xlu0 %546
        %vm552 = vcmask 519648
        %553 = vst.msk [vmem:[%s155] sm:$0xf] %vm552, %v541
        %554 = vst.msk [vmem:[%s155 + $0x4] sm:$0xf] %vm552, %v543
        %555 = vst.msk [vmem:[%s155 + $0x8] sm:$0xf] %vm552, %v545
        %556 = vst.msk [vmem:[%s155 + $0xc] sm:$0xf] %vm552, %v547
        %s557 = sand.u32 %s68, 1
        %s558 = scalar_lea.sflag [#allocation4], %s557
        %s559 = sand.u32 %s68, 1
        %s560 = smul.addr %s559, 16
        %s561 = scalar_lea.vmem [#allocation5], %s560
        // Predicated region
        $region29: #{tpu_custom_call.1} parent=23 // pred_check
          %p562 = pneg %p78
        $region30: #{tpu_custom_call.1} parent=23 // pred_check_branch
          %564 = sbr.rel (%p562) target = $region32
        $region31: #{tpu_custom_call.1} parent=23 // pred_region
          %s565 = smul.u32 4, %s23
          %567 = vsyncadd %s558, 0
          %s568 = smul.addr %s22, 4
          %s569 = sadd.s32 %s565, %s568
          %s570 = smul.addr %s569, 4
          %s571 = scalar_lea.hbm %s1, %s570
          %s572 = sshll.u32 %s561, 4
          %s573 = int_to_ptr.vmem [resolvable:$true] %s572
          %s574 = sshll.u32 %s571, 4
          %s575 = int_to_ptr.hbm [resolvable:$true] %s574
          %580 = dma.vmem_to_hbm [thread:$0]  %s573, 256, %s575, %s558, 64, 64, 4
        $region32: #{tpu_custom_call.1} parent=23 // pred_fallthru
          _
      $region24: #{tpu_custom_call.1} parent=5 // pred_fallthru
        _
      %p581 = scmp.le.s32.totalorder 2, %s13
      // Predicated region
      $region33: #{tpu_custom_call.1} parent=5 // pred_check
        %p582 = pneg %p581
      $region34: #{tpu_custom_call.1} parent=5 // pred_check_branch
        %584 = sbr.rel (%p582) target = $region36
      $region35: #{tpu_custom_call.1} parent=5 // pred_region
        %s585 = ssub.s32 %s13, 2
        // Predicated region
        $region37: #{tpu_custom_call.1} parent=35 // pred_check
          %p586 = pneg %p84
        $region38: #{tpu_custom_call.1} parent=35 // pred_check_branch
          %588 = sbr.rel (%p586) target = $region40
        $region39: #{tpu_custom_call.1} parent=35 // pred_region
          %s589 = sand.u32 %s69, 1
          %s590 = scalar_lea.sflag [#allocation4], %s589
          %s591 = sand.u32 %s69, 1
          %s592 = smul.addr %s591, 16
          %s593 = scalar_lea.vmem [#allocation5], %s592
          %595 = dma.done %s590, 256
        $region40: #{tpu_custom_call.1} parent=35 // pred_fallthru
          _
      $region36: #{tpu_custom_call.1} parent=5 // pred_fallthru
        _
    $region6: #{tpu_custom_call.1} parent=1 // loop_footer
      %s17 = sadd.s32 1, %s13
    $region7: #{tpu_custom_call.1} parent=1 // loop_footer_branch
      %12 = sbr.rel target = $region3
    $region8: #{tpu_custom_call.1} parent=1 // loop_exit
      _
    %596 = vsyncpa [#allocation3], 1
    %s597 = scalar_lea.sflag [#allocation3], 1
    %598 = vsyncpa %s597, 1
    %599 = vsyncpa [#allocation4], 1
    %s600 = scalar_lea.sflag [#allocation4], 1
    %601 = vsyncpa %s600, 1

</llo_original>
